<compile_context>
chip_gen: v5e
topology: v5e:2x2
jax: 0.10.0
libtpu: 0.0.40
codegen_flags: <defaults>
</compile_context>

<pallas_src>
import jax
import jax.numpy as jnp
from jax import lax
from jax.experimental import pallas as pl
from jax.experimental.pallas import tpu as pltpu


def make_autolstm_kernel(B, T, F, H1, E, H, O):
    """Fused forward kernel: encoder + 2-layer LSTM recurrence + linear head."""
    G = 4 * H

    def kernel(x_ref,                               # (T*B, F) time-major, pre-flattened
               ew1_ref, eb1_ref, ew2_ref, eb2_ref,  # encoder params
               wih0_ref, b0_ref,                    # LSTM layer-0 input projection + bias
               whh0_ref,                            # layer-0 hidden weights (prologue only)
               wf_ref, b1_ref,                      # skew-fused recurrence weight, layer-1 bias
               h0_ref, c0_ref,                      # (2, B, H) initial states
               lw_ref, lb_ref,                      # output head (weight as (1, H) row)
               out_ref):                            # (T*B, O)
        # ---- encoder: batched over all T*B rows, off the serial path ----
        z1 = jnp.maximum(
            jnp.dot(x_ref[...], ew1_ref[...], preferred_element_type=jnp.float32)
            + eb1_ref[...], 0.0)
        enc = jnp.maximum(
            jnp.dot(z1, ew2_ref[...], preferred_element_type=jnp.float32)
            + eb2_ref[...], 0.0)                     # (T*B, E)

        # ---- layer-0 input projection for ALL timesteps at once (bias folded in) ----
        gin0 = (jnp.dot(enc, wih0_ref[...], preferred_element_type=jnp.float32)
                + b0_ref[...])                       # (T*B, 4H), register value
        # static per-step slices of a register value: zero-cost, hoistable by the scheduler
        gin0_t = [gin0[t * B:(t + 1) * B, :] for t in range(T)]

        # ---- hoisted weights / bias broadcast / gate lane-mask ----
        wf = wf_ref[...]                                         # (2H, 8H)
        b1b = jnp.broadcast_to(b1_ref[...], (B, G))              # (B, 4H)
        lane = lax.broadcasted_iota(jnp.int32, (B, G), 1)
        gmask = (lane >= 2 * H) & (lane < 3 * H)                 # "g" gate lanes

        def activate(gates):
            # one EUP pass per gate block: sigmoid(x) = 0.5*(tanh(x/2)+1); tanh on g lanes
            th = jnp.tanh(jnp.where(gmask, gates, 0.5 * gates))
            act = jnp.where(gmask, th, 0.5 * (th + 1.0))
            return (act[:, 0:H], act[:, H:2 * H],
                    act[:, 2 * H:3 * H], act[:, 3 * H:4 * H])

        # ---- prologue: layer-0 hidden projection for step 0 from the initial state ----
        c0p = c0_ref[0]
        h1p, c1p = h0_ref[1], c0_ref[1]
        hproj0 = jnp.dot(h0_ref[0], whh0_ref[...],
                         preferred_element_type=jnp.float32)     # (B, 4H)

        # ---- serial recurrence: register state, static unroll, ONE MXU dot per step ----
        h1_list = []
        for t in range(T):
            # layer 0 activation chain (its hidden projection was produced in iter t-1)
            i0, f0, gg0, o0 = activate(gin0_t[t] + hproj0)
            c0p = f0 * c0p + i0 * gg0
            h0c = o0 * jnp.tanh(c0p)
            # skew-fused matmul: layer-1 gates for step t AND layer-0 hproj for step t+1
            xh = jnp.concatenate([h0c, h1p], axis=1)             # (B, 2H)
            fused = jnp.dot(xh, wf, preferred_element_type=jnp.float32)   # (B, 8H)
            hproj0 = fused[:, 0:G]                               # dead on the last step -> free
            i1, f1, gg1, o1 = activate(fused[:, G:2 * G] + b1b)
            c1p = f1 * c1p + i1 * gg1
            h1p = o1 * jnp.tanh(c1p)
            h1_list.append(h1p)

        # ---- output head: O=1 -> VPU multiply + lane reduction + leaky_relu ----
        h1_all = jnp.concatenate(h1_list, axis=0)                # (T*B, H), registers
        y = (jnp.sum(h1_all * lw_ref[...], axis=-1, keepdims=True)
             + lb_ref[...])                                      # (T*B, O)
        out_ref[...] = jnp.where(y > 0, y, 0.01 * y)

    return kernel


def autolstm_forward(x, params, h0, c0):
    """x: (B, T, F) float32. Returns (B, T, O) float32."""
    B, T, F = x.shape
    H1 = params["ew1"].shape[1]
    E = params["ew2"].shape[1]
    H = params["whh0"].shape[0]
    O = params["lw"].shape[1]
    G = 4 * H

    # time-major, pre-flattened: one dense VMEM tile, no in-kernel cross-tile reshape
    x_flat = jnp.transpose(x, (1, 0, 2)).reshape(T * B, F)

    # skew-fused recurrence weight: [h0(t), h1(t-1)] @ [[whh0, wih1],[0, whh1]]
    #   -> [hproj0(t+1) | layer-1 linear gates(t)] in one MXU pass per step
    wf = jnp.concatenate([
        jnp.concatenate([params["whh0"], params["wih1"]], axis=1),
        jnp.concatenate([jnp.zeros((H, G), jnp.float32), params["whh1"]], axis=1),
    ], axis=0)                                                   # (2H, 8H)

    lw_row = params["lw"].T                                      # (O, H) = (1, H)

    kernel = make_autolstm_kernel(B, T, F, H1, E, H, O)
    vmem = pl.BlockSpec(memory_space=pltpu.MemorySpace.VMEM)

    # Note: stay single-core at B=2 on v7x; a batch grid / layer-wavefront split does not
    # shorten the T-step dependency chain and per-step cross-core sync would dominate.
    out_flat = pl.pallas_call(
        kernel,
        out_shape=jax.ShapeDtypeStruct((T * B, O), jnp.float32),
        in_specs=[vmem] * 14,
        out_specs=vmem,
    )(x_flat,
      params["ew1"], params["eb1"], params["ew2"], params["eb2"],
      params["wih0"], params["b0"], params["whh0"],
      wf, params["b1"],
      h0, c0,
      lw_row, params["lb"])

    out_tbo = out_flat.reshape(T, B, O)
    return jnp.transpose(out_tbo, (1, 0, 2))  # back to batch-first (B, T, O)


def reference_forward(x, p, h0, c0):
    """Pure-JAX reference replicating the PyTorch forward semantics."""
    B, T, F = x.shape
    H = h0.shape[-1]
    xf = x.reshape(B * T, F)
    z1 = jnp.maximum(xf @ p["ew1"] + p["eb1"], 0.0)
    enc = jnp.maximum(z1 @ p["ew2"] + p["eb2"], 0.0)
    enc = enc.reshape(B, T, -1)

    def cell(x_t, h, c, wih, whh, b):
        g = x_t @ wih + h @ whh + b
        i = jax.nn.sigmoid(g[:, :H])
        f = jax.nn.sigmoid(g[:, H:2 * H])
        gg = jnp.tanh(g[:, 2 * H:3 * H])
        o = jax.nn.sigmoid(g[:, 3 * H:])
        c2 = f * c + i * gg
        return o * jnp.tanh(c2), c2

    hs = [h0[0], h0[1]]
    cs = [c0[0], c0[1]]
    outs = []
    for t in range(T):
        xt = enc[:, t, :]
        hs[0], cs[0] = cell(xt, hs[0], cs[0], p["wih0"], p["whh0"], p["b0"])
        hs[1], cs[1] = cell(hs[0], hs[1], cs[1], p["wih1"], p["whh1"], p["b1"])
        y = hs[1] @ p["lw"] + p["lb"]
        outs.append(jnp.where(y > 0, y, 0.01 * y))
    return jnp.stack(outs, axis=1)


if __name__ == "__main__":
    # Small shapes consistent with the module's forward:
    B, T, F = 2, 8, 16        # batch, timesteps, feature_size
    H1, E = 32, 16            # encoder hidden / encoder_output_size
    H, L, O = 32, 2, 1        # lstm hidden_size, nr_lstm_stages, output_size

    key = jax.random.PRNGKey(0)
    ks = jax.random.split(key, 16)

    def init(k, shape, fan_in):
        bound = 1.0 / jnp.sqrt(jnp.float32(fan_in))
        return jax.random.uniform(k, shape, jnp.float32, -bound, bound)

    params = {
        # encoder: Linear(F, H1) + ReLU + Linear(H1, E) + ReLU
        # (PyTorch weight (out, in) pre-transposed to (in, out); biases as (1, out))
        "ew1": init(ks[0], (F, H1), F),
        "eb1": init(ks[1], (1, H1), F),
        "ew2": init(ks[2], (H1, E), H1),
        "eb2": init(ks[3], (1, E), H1),
        # LSTM layer 0: W_ih (E, 4H), W_hh (H, 4H), combined bias (1, 4H); gate order i,f,g,o
        "wih0": init(ks[4], (E, 4 * H), H),
        "whh0": init(ks[5], (H, 4 * H), H),
        "b0":   init(ks[6], (1, 4 * H), H) + init(ks[7], (1, 4 * H), H),
        # LSTM layer 1: W_ih (H, 4H)
        "wih1": init(ks[8], (H, 4 * H), H),
        "whh1": init(ks[9], (H, 4 * H), H),
        "b1":   init(ks[10], (1, 4 * H), H) + init(ks[11], (1, 4 * H), H),
        # output head Linear(H, O)
        "lw": init(ks[12], (H, O), H),
        "lb": init(ks[13], (1, O), H),
    }

    x = jax.random.normal(ks[14], (B, T, F), jnp.float32)
    # random_hidden_states=True -> randn initial states (JAX PRNG instead of torch.randn)
    h0 = jax.random.normal(jax.random.fold_in(ks[15], 0), (L, B, H), jnp.float32)
    c0 = jax.random.normal(jax.random.fold_in(ks[15], 1), (L, B, H), jnp.float32)

    out = jax.block_until_ready(autolstm_forward(x, params, h0, c0))
    ref = reference_forward(x, params, h0, c0)

    assert out.shape == (B, T, O)
    assert jnp.allclose(out, ref, atol=1e-5, rtol=1e-4), "kernel/reference mismatch"
    print("KERNEL_OK")
</pallas_src>

<mosaic_0001>
module attributes {stable_mosaic.version = 11 : i64} {
  func.func @kernel(%arg0: memref<16x16xf32, #tpu.memory_space<vmem>>, %arg1: memref<16x32xf32, #tpu.memory_space<vmem>>, %arg2: memref<1x32xf32, #tpu.memory_space<vmem>>, %arg3: memref<32x16xf32, #tpu.memory_space<vmem>>, %arg4: memref<1x16xf32, #tpu.memory_space<vmem>>, %arg5: memref<16x128xf32, #tpu.memory_space<vmem>>, %arg6: memref<1x128xf32, #tpu.memory_space<vmem>>, %arg7: memref<32x128xf32, #tpu.memory_space<vmem>>, %arg8: memref<64x256xf32, #tpu.memory_space<vmem>>, %arg9: memref<1x128xf32, #tpu.memory_space<vmem>>, %arg10: memref<2x2x32xf32, #tpu.memory_space<vmem>>, %arg11: memref<2x2x32xf32, #tpu.memory_space<vmem>>, %arg12: memref<1x32xf32, #tpu.memory_space<vmem>>, %arg13: memref<1x1xf32, #tpu.memory_space<vmem>>, %arg14: memref<16x1xf32, #tpu.memory_space<vmem>>) attributes {dimension_semantics = [], scalar_prefetch = 0 : i64, scratch_operands = 0 : i64, tpu.core_type = #tpu.core_type<tc>} {
    %c0 = arith.constant 0 : index
    %c0_0 = arith.constant 0 : index
    %0 = vector.load %arg0[%c0, %c0_0] : memref<16x16xf32, #tpu.memory_space<vmem>>, vector<16x16xf32>
    %c0_1 = arith.constant 0 : index
    %c0_2 = arith.constant 0 : index
    %1 = vector.load %arg1[%c0_1, %c0_2] : memref<16x32xf32, #tpu.memory_space<vmem>>, vector<16x32xf32>
    %cst = arith.constant dense<0.000000e+00> : vector<16x32xf32>
    %2 = tpu.matmul %0, %1, %cst {dimension_numbers = #tpu.dot_dimension_numbers<[1], [0], [0], [1], [0, 0, 1, 1], [], []>} : vector<16x16xf32>, vector<16x32xf32>, vector<16x32xf32> -> vector<16x32xf32>
    %c0_3 = arith.constant 0 : index
    %c0_4 = arith.constant 0 : index
    %3 = vector.load %arg2[%c0_3, %c0_4] : memref<1x32xf32, #tpu.memory_space<vmem>>, vector<1x32xf32>
    %4 = vector.broadcast %3 : vector<1x32xf32> to vector<16x32xf32>
    %5 = arith.addf %2, %4 : vector<16x32xf32>
    %cst_5 = arith.constant 0.000000e+00 : f32
    %6 = vector.broadcast %cst_5 : f32 to vector<16x32xf32>
    %7 = arith.maximumf %5, %6 : vector<16x32xf32>
    %c0_6 = arith.constant 0 : index
    %c0_7 = arith.constant 0 : index
    %8 = vector.load %arg3[%c0_6, %c0_7] : memref<32x16xf32, #tpu.memory_space<vmem>>, vector<32x16xf32>
    %cst_8 = arith.constant dense<0.000000e+00> : vector<16x16xf32>
    %9 = tpu.matmul %7, %8, %cst_8 {dimension_numbers = #tpu.dot_dimension_numbers<[1], [0], [0], [1], [0, 0, 1, 1], [], []>} : vector<16x32xf32>, vector<32x16xf32>, vector<16x16xf32> -> vector<16x16xf32>
    %c0_9 = arith.constant 0 : index
    %c0_10 = arith.constant 0 : index
    %10 = vector.load %arg4[%c0_9, %c0_10] : memref<1x16xf32, #tpu.memory_space<vmem>>, vector<1x16xf32>
    %11 = vector.broadcast %10 : vector<1x16xf32> to vector<16x16xf32>
    %12 = arith.addf %9, %11 : vector<16x16xf32>
    %cst_11 = arith.constant 0.000000e+00 : f32
    %13 = vector.broadcast %cst_11 : f32 to vector<16x16xf32>
    %14 = arith.maximumf %12, %13 : vector<16x16xf32>
    %c0_12 = arith.constant 0 : index
    %c0_13 = arith.constant 0 : index
    %15 = vector.load %arg5[%c0_12, %c0_13] : memref<16x128xf32, #tpu.memory_space<vmem>>, vector<16x128xf32>
    %cst_14 = arith.constant dense<0.000000e+00> : vector<16x128xf32>
    %16 = tpu.matmul %14, %15, %cst_14 {dimension_numbers = #tpu.dot_dimension_numbers<[1], [0], [0], [1], [0, 0, 1, 1], [], []>} : vector<16x16xf32>, vector<16x128xf32>, vector<16x128xf32> -> vector<16x128xf32>
    %c0_15 = arith.constant 0 : index
    %c0_16 = arith.constant 0 : index
    %17 = vector.load %arg6[%c0_15, %c0_16] : memref<1x128xf32, #tpu.memory_space<vmem>>, vector<1x128xf32>
    %18 = vector.broadcast %17 : vector<1x128xf32> to vector<16x128xf32>
    %19 = arith.addf %16, %18 : vector<16x128xf32>
    %20 = vector.extract_strided_slice %19 {offsets = [0, 0], sizes = [2, 128], strides = [1, 1]} : vector<16x128xf32> to vector<2x128xf32>
    %21 = vector.extract_strided_slice %19 {offsets = [2, 0], sizes = [2, 128], strides = [1, 1]} : vector<16x128xf32> to vector<2x128xf32>
    %22 = vector.extract_strided_slice %19 {offsets = [4, 0], sizes = [2, 128], strides = [1, 1]} : vector<16x128xf32> to vector<2x128xf32>
    %23 = vector.extract_strided_slice %19 {offsets = [6, 0], sizes = [2, 128], strides = [1, 1]} : vector<16x128xf32> to vector<2x128xf32>
    %24 = vector.extract_strided_slice %19 {offsets = [8, 0], sizes = [2, 128], strides = [1, 1]} : vector<16x128xf32> to vector<2x128xf32>
    %25 = vector.extract_strided_slice %19 {offsets = [10, 0], sizes = [2, 128], strides = [1, 1]} : vector<16x128xf32> to vector<2x128xf32>
    %26 = vector.extract_strided_slice %19 {offsets = [12, 0], sizes = [2, 128], strides = [1, 1]} : vector<16x128xf32> to vector<2x128xf32>
    %27 = vector.extract_strided_slice %19 {offsets = [14, 0], sizes = [2, 128], strides = [1, 1]} : vector<16x128xf32> to vector<2x128xf32>
    %c0_17 = arith.constant 0 : index
    %c0_18 = arith.constant 0 : index
    %28 = vector.load %arg8[%c0_17, %c0_18] : memref<64x256xf32, #tpu.memory_space<vmem>>, vector<64x256xf32>
    %c0_19 = arith.constant 0 : index
    %c0_20 = arith.constant 0 : index
    %29 = vector.load %arg9[%c0_19, %c0_20] : memref<1x128xf32, #tpu.memory_space<vmem>>, vector<1x128xf32>
    %30 = vector.shape_cast %29 : vector<1x128xf32> to vector<1x128xf32>
    %31 = vector.broadcast %30 : vector<1x128xf32> to vector<2x128xf32>
    %32 = tpu.iota {dimensions = array<i32: 1>} : vector<2x128xi32>
    %c64_i32 = arith.constant 64 : i32
    %33 = vector.broadcast %c64_i32 : i32 to vector<2x128xi32>
    %34 = arith.cmpi sge, %32, %33 : vector<2x128xi32>
    %c96_i32 = arith.constant 96 : i32
    %35 = vector.broadcast %c96_i32 : i32 to vector<2x128xi32>
    %36 = arith.cmpi slt, %32, %35 : vector<2x128xi32>
    %37 = arith.andi %34, %36 : vector<2x128xi1>
    %c0_21 = arith.constant 0 : index
    %c0_22 = arith.constant 0 : index
    %c0_23 = arith.constant 0 : index
    %38 = vector.load %arg11[%c0_21, %c0_22, %c0_23] : memref<2x2x32xf32, #tpu.memory_space<vmem>>, vector<1x2x32xf32>
    %39 = vector.shape_cast %38 : vector<1x2x32xf32> to vector<2x32xf32>
    %c1 = arith.constant 1 : index
    %c0_24 = arith.constant 0 : index
    %c0_25 = arith.constant 0 : index
    %40 = vector.load %arg10[%c1, %c0_24, %c0_25] : memref<2x2x32xf32, #tpu.memory_space<vmem>>, vector<1x2x32xf32>
    %41 = vector.shape_cast %40 : vector<1x2x32xf32> to vector<2x32xf32>
    %c1_26 = arith.constant 1 : index
    %c0_27 = arith.constant 0 : index
    %c0_28 = arith.constant 0 : index
    %42 = vector.load %arg11[%c1_26, %c0_27, %c0_28] : memref<2x2x32xf32, #tpu.memory_space<vmem>>, vector<1x2x32xf32>
    %43 = vector.shape_cast %42 : vector<1x2x32xf32> to vector<2x32xf32>
    %c0_29 = arith.constant 0 : index
    %c0_30 = arith.constant 0 : index
    %c0_31 = arith.constant 0 : index
    %44 = vector.load %arg10[%c0_29, %c0_30, %c0_31] : memref<2x2x32xf32, #tpu.memory_space<vmem>>, vector<1x2x32xf32>
    %45 = vector.shape_cast %44 : vector<1x2x32xf32> to vector<2x32xf32>
    %c0_32 = arith.constant 0 : index
    %c0_33 = arith.constant 0 : index
    %46 = vector.load %arg7[%c0_32, %c0_33] : memref<32x128xf32, #tpu.memory_space<vmem>>, vector<32x128xf32>
    %cst_34 = arith.constant dense<0.000000e+00> : vector<2x128xf32>
    %47 = tpu.matmul %45, %46, %cst_34 {dimension_numbers = #tpu.dot_dimension_numbers<[1], [0], [0], [1], [0, 0, 1, 1], [], []>} : vector<2x32xf32>, vector<32x128xf32>, vector<2x128xf32> -> vector<2x128xf32>
    %48 = arith.addf %20, %47 : vector<2x128xf32>
    %cst_35 = arith.constant 5.000000e-01 : f32
    %49 = vector.broadcast %cst_35 : f32 to vector<2x128xf32>
    %50 = arith.mulf %49, %48 : vector<2x128xf32>
    %51 = arith.select %37, %48, %50 : vector<2x128xi1>, vector<2x128xf32>
    %52 = math.tanh %51 : vector<2x128xf32>
    %cst_36 = arith.constant 1.000000e+00 : f32
    %53 = vector.broadcast %cst_36 : f32 to vector<2x128xf32>
    %54 = arith.addf %52, %53 : vector<2x128xf32>
    %cst_37 = arith.constant 5.000000e-01 : f32
    %55 = vector.broadcast %cst_37 : f32 to vector<2x128xf32>
    %56 = arith.mulf %55, %54 : vector<2x128xf32>
    %57 = arith.select %37, %52, %56 : vector<2x128xi1>, vector<2x128xf32>
    %58 = vector.extract_strided_slice %57 {offsets = [0, 0], sizes = [2, 32], strides = [1, 1]} : vector<2x128xf32> to vector<2x32xf32>
    %59 = vector.extract_strided_slice %57 {offsets = [0, 32], sizes = [2, 32], strides = [1, 1]} : vector<2x128xf32> to vector<2x32xf32>
    %60 = vector.extract_strided_slice %57 {offsets = [0, 64], sizes = [2, 32], strides = [1, 1]} : vector<2x128xf32> to vector<2x32xf32>
    %61 = vector.extract_strided_slice %57 {offsets = [0, 96], sizes = [2, 32], strides = [1, 1]} : vector<2x128xf32> to vector<2x32xf32>
    %62 = arith.mulf %59, %39 : vector<2x32xf32>
    %63 = arith.mulf %58, %60 : vector<2x32xf32>
    %64 = arith.addf %62, %63 : vector<2x32xf32>
    %65 = math.tanh %64 : vector<2x32xf32>
    %66 = arith.mulf %61, %65 : vector<2x32xf32>
    %67 = tpu.concatenate %66, %41 in 1 : vector<2x32xf32>, vector<2x32xf32> -> vector<2x64xf32>
    %cst_38 = arith.constant dense<0.000000e+00> : vector<2x256xf32>
    %68 = tpu.matmul %67, %28, %cst_38 {dimension_numbers = #tpu.dot_dimension_numbers<[1], [0], [0], [1], [0, 0, 1, 1], [], []>} : vector<2x64xf32>, vector<64x256xf32>, vector<2x256xf32> -> vector<2x256xf32>
    %69 = vector.extract_strided_slice %68 {offsets = [0, 0], sizes = [2, 128], strides = [1, 1]} : vector<2x256xf32> to vector<2x128xf32>
    %70 = vector.extract_strided_slice %68 {offsets = [0, 128], sizes = [2, 128], strides = [1, 1]} : vector<2x256xf32> to vector<2x128xf32>
    %71 = arith.addf %70, %31 : vector<2x128xf32>
    %cst_39 = arith.constant 5.000000e-01 : f32
    %72 = vector.broadcast %cst_39 : f32 to vector<2x128xf32>
    %73 = arith.mulf %72, %71 : vector<2x128xf32>
    %74 = arith.select %37, %71, %73 : vector<2x128xi1>, vector<2x128xf32>
    %75 = math.tanh %74 : vector<2x128xf32>
    %cst_40 = arith.constant 1.000000e+00 : f32
    %76 = vector.broadcast %cst_40 : f32 to vector<2x128xf32>
    %77 = arith.addf %75, %76 : vector<2x128xf32>
    %cst_41 = arith.constant 5.000000e-01 : f32
    %78 = vector.broadcast %cst_41 : f32 to vector<2x128xf32>
    %79 = arith.mulf %78, %77 : vector<2x128xf32>
    %80 = arith.select %37, %75, %79 : vector<2x128xi1>, vector<2x128xf32>
    %81 = vector.extract_strided_slice %80 {offsets = [0, 0], sizes = [2, 32], strides = [1, 1]} : vector<2x128xf32> to vector<2x32xf32>
    %82 = vector.extract_strided_slice %80 {offsets = [0, 32], sizes = [2, 32], strides = [1, 1]} : vector<2x128xf32> to vector<2x32xf32>
    %83 = vector.extract_strided_slice %80 {offsets = [0, 64], sizes = [2, 32], strides = [1, 1]} : vector<2x128xf32> to vector<2x32xf32>
    %84 = vector.extract_strided_slice %80 {offsets = [0, 96], sizes = [2, 32], strides = [1, 1]} : vector<2x128xf32> to vector<2x32xf32>
    %85 = arith.mulf %82, %43 : vector<2x32xf32>
    %86 = arith.mulf %81, %83 : vector<2x32xf32>
    %87 = arith.addf %85, %86 : vector<2x32xf32>
    %88 = math.tanh %87 : vector<2x32xf32>
    %89 = arith.mulf %84, %88 : vector<2x32xf32>
    %90 = arith.addf %21, %69 : vector<2x128xf32>
    %cst_42 = arith.constant 5.000000e-01 : f32
    %91 = vector.broadcast %cst_42 : f32 to vector<2x128xf32>
    %92 = arith.mulf %91, %90 : vector<2x128xf32>
    %93 = arith.select %37, %90, %92 : vector<2x128xi1>, vector<2x128xf32>
    %94 = math.tanh %93 : vector<2x128xf32>
    %cst_43 = arith.constant 1.000000e+00 : f32
    %95 = vector.broadcast %cst_43 : f32 to vector<2x128xf32>
    %96 = arith.addf %94, %95 : vector<2x128xf32>
    %cst_44 = arith.constant 5.000000e-01 : f32
    %97 = vector.broadcast %cst_44 : f32 to vector<2x128xf32>
    %98 = arith.mulf %97, %96 : vector<2x128xf32>
    %99 = arith.select %37, %94, %98 : vector<2x128xi1>, vector<2x128xf32>
    %100 = vector.extract_strided_slice %99 {offsets = [0, 0], sizes = [2, 32], strides = [1, 1]} : vector<2x128xf32> to vector<2x32xf32>
    %101 = vector.extract_strided_slice %99 {offsets = [0, 32], sizes = [2, 32], strides = [1, 1]} : vector<2x128xf32> to vector<2x32xf32>
    %102 = vector.extract_strided_slice %99 {offsets = [0, 64], sizes = [2, 32], strides = [1, 1]} : vector<2x128xf32> to vector<2x32xf32>
    %103 = vector.extract_strided_slice %99 {offsets = [0, 96], sizes = [2, 32], strides = [1, 1]} : vector<2x128xf32> to vector<2x32xf32>
    %104 = arith.mulf %101, %64 : vector<2x32xf32>
    %105 = arith.mulf %100, %102 : vector<2x32xf32>
    %106 = arith.addf %104, %105 : vector<2x32xf32>
    %107 = math.tanh %106 : vector<2x32xf32>
    %108 = arith.mulf %103, %107 : vector<2x32xf32>
    %109 = tpu.concatenate %108, %89 in 1 : vector<2x32xf32>, vector<2x32xf32> -> vector<2x64xf32>
    %cst_45 = arith.constant dense<0.000000e+00> : vector<2x256xf32>
    %110 = tpu.matmul %109, %28, %cst_45 {dimension_numbers = #tpu.dot_dimension_numbers<[1], [0], [0], [1], [0, 0, 1, 1], [], []>} : vector<2x64xf32>, vector<64x256xf32>, vector<2x256xf32> -> vector<2x256xf32>
    %111 = vector.extract_strided_slice %110 {offsets = [0, 0], sizes = [2, 128], strides = [1, 1]} : vector<2x256xf32> to vector<2x128xf32>
    %112 = vector.extract_strided_slice %110 {offsets = [0, 128], sizes = [2, 128], strides = [1, 1]} : vector<2x256xf32> to vector<2x128xf32>
    %113 = arith.addf %112, %31 : vector<2x128xf32>
    %cst_46 = arith.constant 5.000000e-01 : f32
    %114 = vector.broadcast %cst_46 : f32 to vector<2x128xf32>
    %115 = arith.mulf %114, %113 : vector<2x128xf32>
    %116 = arith.select %37, %113, %115 : vector<2x128xi1>, vector<2x128xf32>
    %117 = math.tanh %116 : vector<2x128xf32>
    %cst_47 = arith.constant 1.000000e+00 : f32
    %118 = vector.broadcast %cst_47 : f32 to vector<2x128xf32>
    %119 = arith.addf %117, %118 : vector<2x128xf32>
    %cst_48 = arith.constant 5.000000e-01 : f32
    %120 = vector.broadcast %cst_48 : f32 to vector<2x128xf32>
    %121 = arith.mulf %120, %119 : vector<2x128xf32>
    %122 = arith.select %37, %117, %121 : vector<2x128xi1>, vector<2x128xf32>
    %123 = vector.extract_strided_slice %122 {offsets = [0, 0], sizes = [2, 32], strides = [1, 1]} : vector<2x128xf32> to vector<2x32xf32>
    %124 = vector.extract_strided_slice %122 {offsets = [0, 32], sizes = [2, 32], strides = [1, 1]} : vector<2x128xf32> to vector<2x32xf32>
    %125 = vector.extract_strided_slice %122 {offsets = [0, 64], sizes = [2, 32], strides = [1, 1]} : vector<2x128xf32> to vector<2x32xf32>
    %126 = vector.extract_strided_slice %122 {offsets = [0, 96], sizes = [2, 32], strides = [1, 1]} : vector<2x128xf32> to vector<2x32xf32>
    %127 = arith.mulf %124, %87 : vector<2x32xf32>
    %128 = arith.mulf %123, %125 : vector<2x32xf32>
    %129 = arith.addf %127, %128 : vector<2x32xf32>
    %130 = math.tanh %129 : vector<2x32xf32>
    %131 = arith.mulf %126, %130 : vector<2x32xf32>
    %132 = arith.addf %22, %111 : vector<2x128xf32>
    %cst_49 = arith.constant 5.000000e-01 : f32
    %133 = vector.broadcast %cst_49 : f32 to vector<2x128xf32>
    %134 = arith.mulf %133, %132 : vector<2x128xf32>
    %135 = arith.select %37, %132, %134 : vector<2x128xi1>, vector<2x128xf32>
    %136 = math.tanh %135 : vector<2x128xf32>
    %cst_50 = arith.constant 1.000000e+00 : f32
    %137 = vector.broadcast %cst_50 : f32 to vector<2x128xf32>
    %138 = arith.addf %136, %137 : vector<2x128xf32>
    %cst_51 = arith.constant 5.000000e-01 : f32
    %139 = vector.broadcast %cst_51 : f32 to vector<2x128xf32>
    %140 = arith.mulf %139, %138 : vector<2x128xf32>
    %141 = arith.select %37, %136, %140 : vector<2x128xi1>, vector<2x128xf32>
    %142 = vector.extract_strided_slice %141 {offsets = [0, 0], sizes = [2, 32], strides = [1, 1]} : vector<2x128xf32> to vector<2x32xf32>
    %143 = vector.extract_strided_slice %141 {offsets = [0, 32], sizes = [2, 32], strides = [1, 1]} : vector<2x128xf32> to vector<2x32xf32>
    %144 = vector.extract_strided_slice %141 {offsets = [0, 64], sizes = [2, 32], strides = [1, 1]} : vector<2x128xf32> to vector<2x32xf32>
    %145 = vector.extract_strided_slice %141 {offsets = [0, 96], sizes = [2, 32], strides = [1, 1]} : vector<2x128xf32> to vector<2x32xf32>
    %146 = arith.mulf %143, %106 : vector<2x32xf32>
    %147 = arith.mulf %142, %144 : vector<2x32xf32>
    %148 = arith.addf %146, %147 : vector<2x32xf32>
    %149 = math.tanh %148 : vector<2x32xf32>
    %150 = arith.mulf %145, %149 : vector<2x32xf32>
    %151 = tpu.concatenate %150, %131 in 1 : vector<2x32xf32>, vector<2x32xf32> -> vector<2x64xf32>
    %cst_52 = arith.constant dense<0.000000e+00> : vector<2x256xf32>
    %152 = tpu.matmul %151, %28, %cst_52 {dimension_numbers = #tpu.dot_dimension_numbers<[1], [0], [0], [1], [0, 0, 1, 1], [], []>} : vector<2x64xf32>, vector<64x256xf32>, vector<2x256xf32> -> vector<2x256xf32>
    %153 = vector.extract_strided_slice %152 {offsets = [0, 0], sizes = [2, 128], strides = [1, 1]} : vector<2x256xf32> to vector<2x128xf32>
    %154 = vector.extract_strided_slice %152 {offsets = [0, 128], sizes = [2, 128], strides = [1, 1]} : vector<2x256xf32> to vector<2x128xf32>
    %155 = arith.addf %154, %31 : vector<2x128xf32>
    %cst_53 = arith.constant 5.000000e-01 : f32
    %156 = vector.broadcast %cst_53 : f32 to vector<2x128xf32>
    %157 = arith.mulf %156, %155 : vector<2x128xf32>
    %158 = arith.select %37, %155, %157 : vector<2x128xi1>, vector<2x128xf32>
    %159 = math.tanh %158 : vector<2x128xf32>
    %cst_54 = arith.constant 1.000000e+00 : f32
    %160 = vector.broadcast %cst_54 : f32 to vector<2x128xf32>
    %161 = arith.addf %159, %160 : vector<2x128xf32>
    %cst_55 = arith.constant 5.000000e-01 : f32
    %162 = vector.broadcast %cst_55 : f32 to vector<2x128xf32>
    %163 = arith.mulf %162, %161 : vector<2x128xf32>
    %164 = arith.select %37, %159, %163 : vector<2x128xi1>, vector<2x128xf32>
    %165 = vector.extract_strided_slice %164 {offsets = [0, 0], sizes = [2, 32], strides = [1, 1]} : vector<2x128xf32> to vector<2x32xf32>
    %166 = vector.extract_strided_slice %164 {offsets = [0, 32], sizes = [2, 32], strides = [1, 1]} : vector<2x128xf32> to vector<2x32xf32>
    %167 = vector.extract_strided_slice %164 {offsets = [0, 64], sizes = [2, 32], strides = [1, 1]} : vector<2x128xf32> to vector<2x32xf32>
    %168 = vector.extract_strided_slice %164 {offsets = [0, 96], sizes = [2, 32], strides = [1, 1]} : vector<2x128xf32> to vector<2x32xf32>
    %169 = arith.mulf %166, %129 : vector<2x32xf32>
    %170 = arith.mulf %165, %167 : vector<2x32xf32>
    %171 = arith.addf %169, %170 : vector<2x32xf32>
    %172 = math.tanh %171 : vector<2x32xf32>
    %173 = arith.mulf %168, %172 : vector<2x32xf32>
    %174 = arith.addf %23, %153 : vector<2x128xf32>
    %cst_56 = arith.constant 5.000000e-01 : f32
    %175 = vector.broadcast %cst_56 : f32 to vector<2x128xf32>
    %176 = arith.mulf %175, %174 : vector<2x128xf32>
    %177 = arith.select %37, %174, %176 : vector<2x128xi1>, vector<2x128xf32>
    %178 = math.tanh %177 : vector<2x128xf32>
    %cst_57 = arith.constant 1.000000e+00 : f32
    %179 = vector.broadcast %cst_57 : f32 to vector<2x128xf32>
    %180 = arith.addf %178, %179 : vector<2x128xf32>
    %cst_58 = arith.constant 5.000000e-01 : f32
    %181 = vector.broadcast %cst_58 : f32 to vector<2x128xf32>
    %182 = arith.mulf %181, %180 : vector<2x128xf32>
    %183 = arith.select %37, %178, %182 : vector<2x128xi1>, vector<2x128xf32>
    %184 = vector.extract_strided_slice %183 {offsets = [0, 0], sizes = [2, 32], strides = [1, 1]} : vector<2x128xf32> to vector<2x32xf32>
    %185 = vector.extract_strided_slice %183 {offsets = [0, 32], sizes = [2, 32], strides = [1, 1]} : vector<2x128xf32> to vector<2x32xf32>
    %186 = vector.extract_strided_slice %183 {offsets = [0, 64], sizes = [2, 32], strides = [1, 1]} : vector<2x128xf32> to vector<2x32xf32>
    %187 = vector.extract_strided_slice %183 {offsets = [0, 96], sizes = [2, 32], strides = [1, 1]} : vector<2x128xf32> to vector<2x32xf32>
    %188 = arith.mulf %185, %148 : vector<2x32xf32>
    %189 = arith.mulf %184, %186 : vector<2x32xf32>
    %190 = arith.addf %188, %189 : vector<2x32xf32>
    %191 = math.tanh %190 : vector<2x32xf32>
    %192 = arith.mulf %187, %191 : vector<2x32xf32>
    %193 = tpu.concatenate %192, %173 in 1 : vector<2x32xf32>, vector<2x32xf32> -> vector<2x64xf32>
    %cst_59 = arith.constant dense<0.000000e+00> : vector<2x256xf32>
    %194 = tpu.matmul %193, %28, %cst_59 {dimension_numbers = #tpu.dot_dimension_numbers<[1], [0], [0], [1], [0, 0, 1, 1], [], []>} : vector<2x64xf32>, vector<64x256xf32>, vector<2x256xf32> -> vector<2x256xf32>
    %195 = vector.extract_strided_slice %194 {offsets = [0, 0], sizes = [2, 128], strides = [1, 1]} : vector<2x256xf32> to vector<2x128xf32>
    %196 = vector.extract_strided_slice %194 {offsets = [0, 128], sizes = [2, 128], strides = [1, 1]} : vector<2x256xf32> to vector<2x128xf32>
    %197 = arith.addf %196, %31 : vector<2x128xf32>
    %cst_60 = arith.constant 5.000000e-01 : f32
    %198 = vector.broadcast %cst_60 : f32 to vector<2x128xf32>
    %199 = arith.mulf %198, %197 : vector<2x128xf32>
    %200 = arith.select %37, %197, %199 : vector<2x128xi1>, vector<2x128xf32>
    %201 = math.tanh %200 : vector<2x128xf32>
    %cst_61 = arith.constant 1.000000e+00 : f32
    %202 = vector.broadcast %cst_61 : f32 to vector<2x128xf32>
    %203 = arith.addf %201, %202 : vector<2x128xf32>
    %cst_62 = arith.constant 5.000000e-01 : f32
    %204 = vector.broadcast %cst_62 : f32 to vector<2x128xf32>
    %205 = arith.mulf %204, %203 : vector<2x128xf32>
    %206 = arith.select %37, %201, %205 : vector<2x128xi1>, vector<2x128xf32>
    %207 = vector.extract_strided_slice %206 {offsets = [0, 0], sizes = [2, 32], strides = [1, 1]} : vector<2x128xf32> to vector<2x32xf32>
    %208 = vector.extract_strided_slice %206 {offsets = [0, 32], sizes = [2, 32], strides = [1, 1]} : vector<2x128xf32> to vector<2x32xf32>
    %209 = vector.extract_strided_slice %206 {offsets = [0, 64], sizes = [2, 32], strides = [1, 1]} : vector<2x128xf32> to vector<2x32xf32>
    %210 = vector.extract_strided_slice %206 {offsets = [0, 96], sizes = [2, 32], strides = [1, 1]} : vector<2x128xf32> to vector<2x32xf32>
    %211 = arith.mulf %208, %171 : vector<2x32xf32>
    %212 = arith.mulf %207, %209 : vector<2x32xf32>
    %213 = arith.addf %211, %212 : vector<2x32xf32>
    %214 = math.tanh %213 : vector<2x32xf32>
    %215 = arith.mulf %210, %214 : vector<2x32xf32>
    %216 = arith.addf %24, %195 : vector<2x128xf32>
    %cst_63 = arith.constant 5.000000e-01 : f32
    %217 = vector.broadcast %cst_63 : f32 to vector<2x128xf32>
    %218 = arith.mulf %217, %216 : vector<2x128xf32>
    %219 = arith.select %37, %216, %218 : vector<2x128xi1>, vector<2x128xf32>
    %220 = math.tanh %219 : vector<2x128xf32>
    %cst_64 = arith.constant 1.000000e+00 : f32
    %221 = vector.broadcast %cst_64 : f32 to vector<2x128xf32>
    %222 = arith.addf %220, %221 : vector<2x128xf32>
    %cst_65 = arith.constant 5.000000e-01 : f32
    %223 = vector.broadcast %cst_65 : f32 to vector<2x128xf32>
    %224 = arith.mulf %223, %222 : vector<2x128xf32>
    %225 = arith.select %37, %220, %224 : vector<2x128xi1>, vector<2x128xf32>
    %226 = vector.extract_strided_slice %225 {offsets = [0, 0], sizes = [2, 32], strides = [1, 1]} : vector<2x128xf32> to vector<2x32xf32>
    %227 = vector.extract_strided_slice %225 {offsets = [0, 32], sizes = [2, 32], strides = [1, 1]} : vector<2x128xf32> to vector<2x32xf32>
    %228 = vector.extract_strided_slice %225 {offsets = [0, 64], sizes = [2, 32], strides = [1, 1]} : vector<2x128xf32> to vector<2x32xf32>
    %229 = vector.extract_strided_slice %225 {offsets = [0, 96], sizes = [2, 32], strides = [1, 1]} : vector<2x128xf32> to vector<2x32xf32>
    %230 = arith.mulf %227, %190 : vector<2x32xf32>
    %231 = arith.mulf %226, %228 : vector<2x32xf32>
    %232 = arith.addf %230, %231 : vector<2x32xf32>
    %233 = math.tanh %232 : vector<2x32xf32>
    %234 = arith.mulf %229, %233 : vector<2x32xf32>
    %235 = tpu.concatenate %234, %215 in 1 : vector<2x32xf32>, vector<2x32xf32> -> vector<2x64xf32>
    %cst_66 = arith.constant dense<0.000000e+00> : vector<2x256xf32>
    %236 = tpu.matmul %235, %28, %cst_66 {dimension_numbers = #tpu.dot_dimension_numbers<[1], [0], [0], [1], [0, 0, 1, 1], [], []>} : vector<2x64xf32>, vector<64x256xf32>, vector<2x256xf32> -> vector<2x256xf32>
    %237 = vector.extract_strided_slice %236 {offsets = [0, 0], sizes = [2, 128], strides = [1, 1]} : vector<2x256xf32> to vector<2x128xf32>
    %238 = vector.extract_strided_slice %236 {offsets = [0, 128], sizes = [2, 128], strides = [1, 1]} : vector<2x256xf32> to vector<2x128xf32>
    %239 = arith.addf %238, %31 : vector<2x128xf32>
    %cst_67 = arith.constant 5.000000e-01 : f32
    %240 = vector.broadcast %cst_67 : f32 to vector<2x128xf32>
    %241 = arith.mulf %240, %239 : vector<2x128xf32>
    %242 = arith.select %37, %239, %241 : vector<2x128xi1>, vector<2x128xf32>
    %243 = math.tanh %242 : vector<2x128xf32>
    %cst_68 = arith.constant 1.000000e+00 : f32
    %244 = vector.broadcast %cst_68 : f32 to vector<2x128xf32>
    %245 = arith.addf %243, %244 : vector<2x128xf32>
    %cst_69 = arith.constant 5.000000e-01 : f32
    %246 = vector.broadcast %cst_69 : f32 to vector<2x128xf32>
    %247 = arith.mulf %246, %245 : vector<2x128xf32>
    %248 = arith.select %37, %243, %247 : vector<2x128xi1>, vector<2x128xf32>
    %249 = vector.extract_strided_slice %248 {offsets = [0, 0], sizes = [2, 32], strides = [1, 1]} : vector<2x128xf32> to vector<2x32xf32>
    %250 = vector.extract_strided_slice %248 {offsets = [0, 32], sizes = [2, 32], strides = [1, 1]} : vector<2x128xf32> to vector<2x32xf32>
    %251 = vector.extract_strided_slice %248 {offsets = [0, 64], sizes = [2, 32], strides = [1, 1]} : vector<2x128xf32> to vector<2x32xf32>
    %252 = vector.extract_strided_slice %248 {offsets = [0, 96], sizes = [2, 32], strides = [1, 1]} : vector<2x128xf32> to vector<2x32xf32>
    %253 = arith.mulf %250, %213 : vector<2x32xf32>
    %254 = arith.mulf %249, %251 : vector<2x32xf32>
    %255 = arith.addf %253, %254 : vector<2x32xf32>
    %256 = math.tanh %255 : vector<2x32xf32>
    %257 = arith.mulf %252, %256 : vector<2x32xf32>
    %258 = arith.addf %25, %237 : vector<2x128xf32>
    %cst_70 = arith.constant 5.000000e-01 : f32
    %259 = vector.broadcast %cst_70 : f32 to vector<2x128xf32>
    %260 = arith.mulf %259, %258 : vector<2x128xf32>
    %261 = arith.select %37, %258, %260 : vector<2x128xi1>, vector<2x128xf32>
    %262 = math.tanh %261 : vector<2x128xf32>
    %cst_71 = arith.constant 1.000000e+00 : f32
    %263 = vector.broadcast %cst_71 : f32 to vector<2x128xf32>
    %264 = arith.addf %262, %263 : vector<2x128xf32>
    %cst_72 = arith.constant 5.000000e-01 : f32
    %265 = vector.broadcast %cst_72 : f32 to vector<2x128xf32>
    %266 = arith.mulf %265, %264 : vector<2x128xf32>
    %267 = arith.select %37, %262, %266 : vector<2x128xi1>, vector<2x128xf32>
    %268 = vector.extract_strided_slice %267 {offsets = [0, 0], sizes = [2, 32], strides = [1, 1]} : vector<2x128xf32> to vector<2x32xf32>
    %269 = vector.extract_strided_slice %267 {offsets = [0, 32], sizes = [2, 32], strides = [1, 1]} : vector<2x128xf32> to vector<2x32xf32>
    %270 = vector.extract_strided_slice %267 {offsets = [0, 64], sizes = [2, 32], strides = [1, 1]} : vector<2x128xf32> to vector<2x32xf32>
    %271 = vector.extract_strided_slice %267 {offsets = [0, 96], sizes = [2, 32], strides = [1, 1]} : vector<2x128xf32> to vector<2x32xf32>
    %272 = arith.mulf %269, %232 : vector<2x32xf32>
    %273 = arith.mulf %268, %270 : vector<2x32xf32>
    %274 = arith.addf %272, %273 : vector<2x32xf32>
    %275 = math.tanh %274 : vector<2x32xf32>
    %276 = arith.mulf %271, %275 : vector<2x32xf32>
    %277 = tpu.concatenate %276, %257 in 1 : vector<2x32xf32>, vector<2x32xf32> -> vector<2x64xf32>
    %cst_73 = arith.constant dense<0.000000e+00> : vector<2x256xf32>
    %278 = tpu.matmul %277, %28, %cst_73 {dimension_numbers = #tpu.dot_dimension_numbers<[1], [0], [0], [1], [0, 0, 1, 1], [], []>} : vector<2x64xf32>, vector<64x256xf32>, vector<2x256xf32> -> vector<2x256xf32>
    %279 = vector.extract_strided_slice %278 {offsets = [0, 0], sizes = [2, 128], strides = [1, 1]} : vector<2x256xf32> to vector<2x128xf32>
    %280 = vector.extract_strided_slice %278 {offsets = [0, 128], sizes = [2, 128], strides = [1, 1]} : vector<2x256xf32> to vector<2x128xf32>
    %281 = arith.addf %280, %31 : vector<2x128xf32>
    %cst_74 = arith.constant 5.000000e-01 : f32
    %282 = vector.broadcast %cst_74 : f32 to vector<2x128xf32>
    %283 = arith.mulf %282, %281 : vector<2x128xf32>
    %284 = arith.select %37, %281, %283 : vector<2x128xi1>, vector<2x128xf32>
    %285 = math.tanh %284 : vector<2x128xf32>
    %cst_75 = arith.constant 1.000000e+00 : f32
    %286 = vector.broadcast %cst_75 : f32 to vector<2x128xf32>
    %287 = arith.addf %285, %286 : vector<2x128xf32>
    %cst_76 = arith.constant 5.000000e-01 : f32
    %288 = vector.broadcast %cst_76 : f32 to vector<2x128xf32>
    %289 = arith.mulf %288, %287 : vector<2x128xf32>
    %290 = arith.select %37, %285, %289 : vector<2x128xi1>, vector<2x128xf32>
    %291 = vector.extract_strided_slice %290 {offsets = [0, 0], sizes = [2, 32], strides = [1, 1]} : vector<2x128xf32> to vector<2x32xf32>
    %292 = vector.extract_strided_slice %290 {offsets = [0, 32], sizes = [2, 32], strides = [1, 1]} : vector<2x128xf32> to vector<2x32xf32>
    %293 = vector.extract_strided_slice %290 {offsets = [0, 64], sizes = [2, 32], strides = [1, 1]} : vector<2x128xf32> to vector<2x32xf32>
    %294 = vector.extract_strided_slice %290 {offsets = [0, 96], sizes = [2, 32], strides = [1, 1]} : vector<2x128xf32> to vector<2x32xf32>
    %295 = arith.mulf %292, %255 : vector<2x32xf32>
    %296 = arith.mulf %291, %293 : vector<2x32xf32>
    %297 = arith.addf %295, %296 : vector<2x32xf32>
    %298 = math.tanh %297 : vector<2x32xf32>
    %299 = arith.mulf %294, %298 : vector<2x32xf32>
    %300 = arith.addf %26, %279 : vector<2x128xf32>
    %cst_77 = arith.constant 5.000000e-01 : f32
    %301 = vector.broadcast %cst_77 : f32 to vector<2x128xf32>
    %302 = arith.mulf %301, %300 : vector<2x128xf32>
    %303 = arith.select %37, %300, %302 : vector<2x128xi1>, vector<2x128xf32>
    %304 = math.tanh %303 : vector<2x128xf32>
    %cst_78 = arith.constant 1.000000e+00 : f32
    %305 = vector.broadcast %cst_78 : f32 to vector<2x128xf32>
    %306 = arith.addf %304, %305 : vector<2x128xf32>
    %cst_79 = arith.constant 5.000000e-01 : f32
    %307 = vector.broadcast %cst_79 : f32 to vector<2x128xf32>
    %308 = arith.mulf %307, %306 : vector<2x128xf32>
    %309 = arith.select %37, %304, %308 : vector<2x128xi1>, vector<2x128xf32>
    %310 = vector.extract_strided_slice %309 {offsets = [0, 0], sizes = [2, 32], strides = [1, 1]} : vector<2x128xf32> to vector<2x32xf32>
    %311 = vector.extract_strided_slice %309 {offsets = [0, 32], sizes = [2, 32], strides = [1, 1]} : vector<2x128xf32> to vector<2x32xf32>
    %312 = vector.extract_strided_slice %309 {offsets = [0, 64], sizes = [2, 32], strides = [1, 1]} : vector<2x128xf32> to vector<2x32xf32>
    %313 = vector.extract_strided_slice %309 {offsets = [0, 96], sizes = [2, 32], strides = [1, 1]} : vector<2x128xf32> to vector<2x32xf32>
    %314 = arith.mulf %311, %274 : vector<2x32xf32>
    %315 = arith.mulf %310, %312 : vector<2x32xf32>
    %316 = arith.addf %314, %315 : vector<2x32xf32>
    %317 = math.tanh %316 : vector<2x32xf32>
    %318 = arith.mulf %313, %317 : vector<2x32xf32>
    %319 = tpu.concatenate %318, %299 in 1 : vector<2x32xf32>, vector<2x32xf32> -> vector<2x64xf32>
    %cst_80 = arith.constant dense<0.000000e+00> : vector<2x256xf32>
    %320 = tpu.matmul %319, %28, %cst_80 {dimension_numbers = #tpu.dot_dimension_numbers<[1], [0], [0], [1], [0, 0, 1, 1], [], []>} : vector<2x64xf32>, vector<64x256xf32>, vector<2x256xf32> -> vector<2x256xf32>
    %321 = vector.extract_strided_slice %320 {offsets = [0, 0], sizes = [2, 128], strides = [1, 1]} : vector<2x256xf32> to vector<2x128xf32>
    %322 = vector.extract_strided_slice %320 {offsets = [0, 128], sizes = [2, 128], strides = [1, 1]} : vector<2x256xf32> to vector<2x128xf32>
    %323 = arith.addf %322, %31 : vector<2x128xf32>
    %cst_81 = arith.constant 5.000000e-01 : f32
    %324 = vector.broadcast %cst_81 : f32 to vector<2x128xf32>
    %325 = arith.mulf %324, %323 : vector<2x128xf32>
    %326 = arith.select %37, %323, %325 : vector<2x128xi1>, vector<2x128xf32>
    %327 = math.tanh %326 : vector<2x128xf32>
    %cst_82 = arith.constant 1.000000e+00 : f32
    %328 = vector.broadcast %cst_82 : f32 to vector<2x128xf32>
    %329 = arith.addf %327, %328 : vector<2x128xf32>
    %cst_83 = arith.constant 5.000000e-01 : f32
    %330 = vector.broadcast %cst_83 : f32 to vector<2x128xf32>
    %331 = arith.mulf %330, %329 : vector<2x128xf32>
    %332 = arith.select %37, %327, %331 : vector<2x128xi1>, vector<2x128xf32>
    %333 = vector.extract_strided_slice %332 {offsets = [0, 0], sizes = [2, 32], strides = [1, 1]} : vector<2x128xf32> to vector<2x32xf32>
    %334 = vector.extract_strided_slice %332 {offsets = [0, 32], sizes = [2, 32], strides = [1, 1]} : vector<2x128xf32> to vector<2x32xf32>
    %335 = vector.extract_strided_slice %332 {offsets = [0, 64], sizes = [2, 32], strides = [1, 1]} : vector<2x128xf32> to vector<2x32xf32>
    %336 = vector.extract_strided_slice %332 {offsets = [0, 96], sizes = [2, 32], strides = [1, 1]} : vector<2x128xf32> to vector<2x32xf32>
    %337 = arith.mulf %334, %297 : vector<2x32xf32>
    %338 = arith.mulf %333, %335 : vector<2x32xf32>
    %339 = arith.addf %337, %338 : vector<2x32xf32>
    %340 = math.tanh %339 : vector<2x32xf32>
    %341 = arith.mulf %336, %340 : vector<2x32xf32>
    %342 = arith.addf %27, %321 : vector<2x128xf32>
    %cst_84 = arith.constant 5.000000e-01 : f32
    %343 = vector.broadcast %cst_84 : f32 to vector<2x128xf32>
    %344 = arith.mulf %343, %342 : vector<2x128xf32>
    %345 = arith.select %37, %342, %344 : vector<2x128xi1>, vector<2x128xf32>
    %346 = math.tanh %345 : vector<2x128xf32>
    %cst_85 = arith.constant 1.000000e+00 : f32
    %347 = vector.broadcast %cst_85 : f32 to vector<2x128xf32>
    %348 = arith.addf %346, %347 : vector<2x128xf32>
    %cst_86 = arith.constant 5.000000e-01 : f32
    %349 = vector.broadcast %cst_86 : f32 to vector<2x128xf32>
    %350 = arith.mulf %349, %348 : vector<2x128xf32>
    %351 = arith.select %37, %346, %350 : vector<2x128xi1>, vector<2x128xf32>
    %352 = vector.extract_strided_slice %351 {offsets = [0, 0], sizes = [2, 32], strides = [1, 1]} : vector<2x128xf32> to vector<2x32xf32>
    %353 = vector.extract_strided_slice %351 {offsets = [0, 32], sizes = [2, 32], strides = [1, 1]} : vector<2x128xf32> to vector<2x32xf32>
    %354 = vector.extract_strided_slice %351 {offsets = [0, 64], sizes = [2, 32], strides = [1, 1]} : vector<2x128xf32> to vector<2x32xf32>
    %355 = vector.extract_strided_slice %351 {offsets = [0, 96], sizes = [2, 32], strides = [1, 1]} : vector<2x128xf32> to vector<2x32xf32>
    %356 = arith.mulf %353, %316 : vector<2x32xf32>
    %357 = arith.mulf %352, %354 : vector<2x32xf32>
    %358 = arith.addf %356, %357 : vector<2x32xf32>
    %359 = math.tanh %358 : vector<2x32xf32>
    %360 = arith.mulf %355, %359 : vector<2x32xf32>
    %361 = tpu.concatenate %360, %341 in 1 : vector<2x32xf32>, vector<2x32xf32> -> vector<2x64xf32>
    %cst_87 = arith.constant dense<0.000000e+00> : vector<2x256xf32>
    %362 = tpu.matmul %361, %28, %cst_87 {dimension_numbers = #tpu.dot_dimension_numbers<[1], [0], [0], [1], [0, 0, 1, 1], [], []>} : vector<2x64xf32>, vector<64x256xf32>, vector<2x256xf32> -> vector<2x256xf32>
    %363 = vector.extract_strided_slice %362 {offsets = [0, 128], sizes = [2, 128], strides = [1, 1]} : vector<2x256xf32> to vector<2x128xf32>
    %364 = arith.addf %363, %31 : vector<2x128xf32>
    %cst_88 = arith.constant 5.000000e-01 : f32
    %365 = vector.broadcast %cst_88 : f32 to vector<2x128xf32>
    %366 = arith.mulf %365, %364 : vector<2x128xf32>
    %367 = arith.select %37, %364, %366 : vector<2x128xi1>, vector<2x128xf32>
    %368 = math.tanh %367 : vector<2x128xf32>
    %cst_89 = arith.constant 1.000000e+00 : f32
    %369 = vector.broadcast %cst_89 : f32 to vector<2x128xf32>
    %370 = arith.addf %368, %369 : vector<2x128xf32>
    %cst_90 = arith.constant 5.000000e-01 : f32
    %371 = vector.broadcast %cst_90 : f32 to vector<2x128xf32>
    %372 = arith.mulf %371, %370 : vector<2x128xf32>
    %373 = arith.select %37, %368, %372 : vector<2x128xi1>, vector<2x128xf32>
    %374 = vector.extract_strided_slice %373 {offsets = [0, 0], sizes = [2, 32], strides = [1, 1]} : vector<2x128xf32> to vector<2x32xf32>
    %375 = vector.extract_strided_slice %373 {offsets = [0, 32], sizes = [2, 32], strides = [1, 1]} : vector<2x128xf32> to vector<2x32xf32>
    %376 = vector.extract_strided_slice %373 {offsets = [0, 64], sizes = [2, 32], strides = [1, 1]} : vector<2x128xf32> to vector<2x32xf32>
    %377 = vector.extract_strided_slice %373 {offsets = [0, 96], sizes = [2, 32], strides = [1, 1]} : vector<2x128xf32> to vector<2x32xf32>
    %378 = arith.mulf %375, %339 : vector<2x32xf32>
    %379 = arith.mulf %374, %376 : vector<2x32xf32>
    %380 = arith.addf %378, %379 : vector<2x32xf32>
    %381 = math.tanh %380 : vector<2x32xf32>
    %382 = arith.mulf %377, %381 : vector<2x32xf32>
    %383 = tpu.concatenate %89, %131, %173, %215, %257, %299, %341, %382 in 0 : vector<2x32xf32>, vector<2x32xf32>, vector<2x32xf32>, vector<2x32xf32>, vector<2x32xf32>, vector<2x32xf32>, vector<2x32xf32>, vector<2x32xf32> -> vector<16x32xf32>
    %c0_91 = arith.constant 0 : index
    %c0_92 = arith.constant 0 : index
    %384 = vector.load %arg12[%c0_91, %c0_92] : memref<1x32xf32, #tpu.memory_space<vmem>>, vector<1x32xf32>
    %385 = vector.broadcast %384 : vector<1x32xf32> to vector<16x32xf32>
    %386 = arith.mulf %383, %385 : vector<16x32xf32>
    %cst_93 = arith.constant dense<0.000000e+00> : vector<16xf32>
    %387 = vector.multi_reduction <add>, %386, %cst_93 [1] : vector<16x32xf32> to vector<16xf32>
    %388 = vector.shape_cast %387 : vector<16xf32> to vector<16x1xf32>
    %c0_94 = arith.constant 0 : index
    %c0_95 = arith.constant 0 : index
    %389 = vector.load %arg13[%c0_94, %c0_95] : memref<1x1xf32, #tpu.memory_space<vmem>>, vector<1x1xf32>
    %390 = vector.broadcast %389 : vector<1x1xf32> to vector<16x1xf32>
    %391 = arith.addf %388, %390 : vector<16x1xf32>
    %cst_96 = arith.constant 0.000000e+00 : f32
    %392 = vector.broadcast %cst_96 : f32 to vector<16x1xf32>
    %393 = arith.cmpf ogt, %391, %392 : vector<16x1xf32>
    %cst_97 = arith.constant 0.00999999977 : f32
    %394 = vector.broadcast %cst_97 : f32 to vector<16x1xf32>
    %395 = arith.mulf %394, %391 : vector<16x1xf32>
    %396 = arith.select %393, %391, %395 : vector<16x1xi1>, vector<16x1xf32>
    %c0_98 = arith.constant 0 : index
    %c0_99 = arith.constant 0 : index
    %397 = vector.load %arg14[%c0_98, %c0_99] : memref<16x1xf32, #tpu.memory_space<vmem>>, vector<16x1xf32>
    tpu.vector_store %arg14[%c0_98, %c0_99], %396 {strides = array<i32>} : memref<16x1xf32, #tpu.memory_space<vmem>>, vector<16x1xf32>,
    return
  }
}

</mosaic_0001>

<llo_original>
// kernel: tpu_custom_call.1
$region0: #{tpu_custom_call.1}
  #allocation0 [shape = 'u32[]', space=smem, size = 0x4, offset = 0x4, fixed_abs, tag = 'smem constant byte address 0x4 - core index']
  #allocation1 [shape = 'u32[72,128]{1,0:T(1,128)}', space=vmem, size = 0x9000, scoped, tag = 'internal scratch']
  #allocation2 [shape = 'f32[1,1]{1,0:T(1,128)S(1)}', space=vmem, size = 0x200, scoped, tag = 'scoped memory for tpu_custom_call.1']
  %s0 = inlined_call_operand.vmem [shape: f32[16,16], index: 0, kind: input, shape index: {}]
  %s1 = inlined_call_operand.hbm [shape: f32[16,32], index: 1, kind: input, shape index: {}]
  %s2 = inlined_call_operand.hbm [shape: f32[1,32], index: 2, kind: input, shape index: {}]
  %s3 = inlined_call_operand.vmem [shape: f32[32,16], index: 3, kind: input, shape index: {}]
  %s4 = inlined_call_operand.hbm [shape: f32[1,16], index: 4, kind: input, shape index: {}]
  %s5 = inlined_call_operand.hbm [shape: f32[16,128], index: 5, kind: input, shape index: {}]
  %s6 = inlined_call_operand.hbm [shape: f32[1,128], index: 6, kind: input, shape index: {}]
  %s7 = inlined_call_operand.vmem [shape: f32[32,128], index: 7, kind: input, shape index: {}]
  %s8 = inlined_call_operand.hbm [shape: f32[64,256], index: 8, kind: input, shape index: {}]
  %s9 = inlined_call_operand.vmem [shape: f32[1,128], index: 9, kind: input, shape index: {}]
  %s10 = inlined_call_operand.vmem [shape: f32[2,2,32], index: 10, kind: input, shape index: {}]
  %s11 = inlined_call_operand.vmem [shape: f32[2,2,32], index: 11, kind: input, shape index: {}]
  %s12 = inlined_call_operand.vmem [shape: f32[1,32], index: 12, kind: input, shape index: {}]
  %s13 = inlined_call_operand.<no memory space> [shape: f32[1,1], index: 13, kind: input, shape index: {}]
  %s14 = inlined_call_operand.vmem [shape: f32[16,1], index: 14, kind: output, shape index: {}]
  %s15 = sld [smem:[#allocation0]]
  $region90: #{tpu_custom_call.1} parent=0
    _
  %s17 = ssub.s32 1, %s15
  %s18 = scalar_select 0, %s17, %s15
  %v19 = vstv %s13
  %20 = vst [vmem:[#allocation2] sm:$0x1] %v19
  $region1: #{tpu_custom_call.1} parent=0
    #allocation3 [shape = 'u8[8192]{0}', space=vmem, size = 0x2000, scoped, tag = 'input window, operand 1, single buffered']
    #allocation4 [shape = 's32[1]{0}', space=sflag, size = 0x4, scoped, tag = 'scoped memory for tpu_custom_call.1']
    #allocation5 [shape = 'u8[512]{0}', space=vmem, size = 0x400, scoped, tag = 'input window, operand 2, single buffered']
    #allocation6 [shape = 's32[1]{0}', space=sflag, size = 0x4, scoped, tag = 'scoped memory for tpu_custom_call.1']
    #allocation7 [shape = 'u8[512]{0}', space=vmem, size = 0x400, scoped, tag = 'input window, operand 4, single buffered']
    #allocation8 [shape = 'u8[8192]{0}', space=vmem, size = 0x2000, scoped, tag = 'input window, operand 5, single buffered']
    #allocation9 [shape = 's32[1]{0}', space=sflag, size = 0x4, scoped, tag = 'scoped memory for tpu_custom_call.1']
    #allocation10 [shape = 'u8[512]{0}', space=vmem, size = 0x400, scoped, tag = 'input window, operand 6, single buffered']
    #allocation11 [shape = 'u8[65536]{0}', space=vmem, size = 0x10000, scoped, tag = 'input window, operand 8, single buffered']
    #allocation12 [shape = 's32[1]{0}', space=sflag, size = 0x4, scoped, tag = 'scoped memory for tpu_custom_call.1']
    %21 = vsyncpa [#allocation4], 0
    %22 = vsyncpa [#allocation6], 0
    %23 = vsyncpa [#allocation9], 0
    %24 = vsyncpa [#allocation12], 0
    // Predicated region
    $region2: #{tpu_custom_call.1} parent=1 // pred_check
      _
    $region3: #{tpu_custom_call.1} parent=1 // pred_check_branch
      %26 = sbr.rel (0) target = $region5
    $region4: #{tpu_custom_call.1} parent=1 // pred_region
      _
    $region5: #{tpu_custom_call.1} parent=1 // pred_fallthru
      _
    // Predicated region
    $region6: #{tpu_custom_call.1} parent=1 // pred_check
      _
    $region7: #{tpu_custom_call.1} parent=1 // pred_check_branch
      %28 = sbr.rel (0) target = $region9
    $region8: #{tpu_custom_call.1} parent=1 // pred_region
      %30 = vsyncadd [#allocation4], 0
      %s31 = sshll.u32 %s1, 4
      %s32 = int_to_ptr.hbm [resolvable:$true] %s31
      %s33 = sshll.u32 [#allocation3], 4
      %s34 = int_to_ptr.vmem [resolvable:$true] %s33
      %39 = dma.hbm_to_vmem [thread:$0]  %s32, 256, %s34, [#allocation4], 128, 128, 8
    $region9: #{tpu_custom_call.1} parent=1 // pred_fallthru
      _
    // Predicated region
    $region10: #{tpu_custom_call.1} parent=1 // pred_check
      _
    $region11: #{tpu_custom_call.1} parent=1 // pred_check_branch
      %41 = sbr.rel (0) target = $region13
    $region12: #{tpu_custom_call.1} parent=1 // pred_region
      %43 = vsyncadd [#allocation6], 0
      %s45 = sshll.u32 %s2, 4
      %s46 = int_to_ptr.hbm [resolvable:$true] %s45
      %s47 = sshll.u32 [#allocation5], 4
      %s48 = int_to_ptr.vmem [resolvable:$true] %s47
      %50 = dma.hbm_to_vmem [thread:$0]  %s46, 16, %s48, [#allocation6]
    $region13: #{tpu_custom_call.1} parent=1 // pred_fallthru
      _
    // Predicated region
    $region14: #{tpu_custom_call.1} parent=1 // pred_check
      _
    $region15: #{tpu_custom_call.1} parent=1 // pred_check_branch
      %52 = sbr.rel (0) target = $region17
    $region16: #{tpu_custom_call.1} parent=1 // pred_region
      _
    $region17: #{tpu_custom_call.1} parent=1 // pred_fallthru
      _
    // Predicated region
    $region18: #{tpu_custom_call.1} parent=1 // pred_check
      _
    $region19: #{tpu_custom_call.1} parent=1 // pred_check_branch
      %54 = sbr.rel (0) target = $region21
    $region20: #{tpu_custom_call.1} parent=1 // pred_region
      %56 = vsyncadd [#allocation6], 0
      %s58 = sshll.u32 %s4, 4
      %s59 = int_to_ptr.hbm [resolvable:$true] %s58
      %s60 = sshll.u32 [#allocation7], 4
      %s61 = int_to_ptr.vmem [resolvable:$true] %s60
      %63 = dma.hbm_to_vmem [thread:$0]  %s59, 16, %s61, [#allocation6]
    $region21: #{tpu_custom_call.1} parent=1 // pred_fallthru
      _
    // Predicated region
    $region22: #{tpu_custom_call.1} parent=1 // pred_check
      _
    $region23: #{tpu_custom_call.1} parent=1 // pred_check_branch
      %65 = sbr.rel (0) target = $region25
    $region24: #{tpu_custom_call.1} parent=1 // pred_region
      %67 = vsyncadd [#allocation9], 0
      %s68 = sshll.u32 %s5, 4
      %s69 = int_to_ptr.hbm [resolvable:$true] %s68
      %s70 = sshll.u32 [#allocation8], 4
      %s71 = int_to_ptr.vmem [resolvable:$true] %s70
      %76 = dma.hbm_to_vmem [thread:$0]  %s69, 256, %s71, [#allocation9], 128, 128, 8
    $region25: #{tpu_custom_call.1} parent=1 // pred_fallthru
      _
    // Predicated region
    $region26: #{tpu_custom_call.1} parent=1 // pred_check
      _
    $region27: #{tpu_custom_call.1} parent=1 // pred_check_branch
      %78 = sbr.rel (0) target = $region29
    $region28: #{tpu_custom_call.1} parent=1 // pred_region
      %80 = vsyncadd [#allocation9], 0
      %s82 = sshll.u32 %s6, 4
      %s83 = int_to_ptr.hbm [resolvable:$true] %s82
      %s84 = sshll.u32 [#allocation10], 4
      %s85 = int_to_ptr.vmem [resolvable:$true] %s84
      %87 = dma.hbm_to_vmem [thread:$0]  %s83, 16, %s85, [#allocation9]
    $region29: #{tpu_custom_call.1} parent=1 // pred_fallthru
      _
    // Predicated region
    $region30: #{tpu_custom_call.1} parent=1 // pred_check
      _
    $region31: #{tpu_custom_call.1} parent=1 // pred_check_branch
      %89 = sbr.rel (0) target = $region33
    $region32: #{tpu_custom_call.1} parent=1 // pred_region
      _
    $region33: #{tpu_custom_call.1} parent=1 // pred_fallthru
      _
    // Predicated region
    $region34: #{tpu_custom_call.1} parent=1 // pred_check
      _
    $region35: #{tpu_custom_call.1} parent=1 // pred_check_branch
      %91 = sbr.rel (0) target = $region37
    $region36: #{tpu_custom_call.1} parent=1 // pred_region
      %93 = vsyncadd [#allocation12], 0
      %s94 = sshll.u32 %s8, 4
      %s95 = int_to_ptr.hbm [resolvable:$true] %s94
      %s96 = sshll.u32 [#allocation11], 4
      %s97 = int_to_ptr.vmem [resolvable:$true] %s96
      %102 = dma.hbm_to_vmem [thread:$0]  %s95, 2048, %s97, [#allocation12], 256, 256, 16
    $region37: #{tpu_custom_call.1} parent=1 // pred_fallthru
      _
    // Predicated region
    $region38: #{tpu_custom_call.1} parent=1 // pred_check
      _
    $region39: #{tpu_custom_call.1} parent=1 // pred_check_branch
      %104 = sbr.rel (0) target = $region41
    $region40: #{tpu_custom_call.1} parent=1 // pred_region
      _
    $region41: #{tpu_custom_call.1} parent=1 // pred_fallthru
      _
    // Predicated region
    $region42: #{tpu_custom_call.1} parent=1 // pred_check
      _
    $region43: #{tpu_custom_call.1} parent=1 // pred_check_branch
      %106 = sbr.rel (0) target = $region45
    $region44: #{tpu_custom_call.1} parent=1 // pred_region
      _
    $region45: #{tpu_custom_call.1} parent=1 // pred_fallthru
      _
    // Predicated region
    $region46: #{tpu_custom_call.1} parent=1 // pred_check
      _
    $region47: #{tpu_custom_call.1} parent=1 // pred_check_branch
      %108 = sbr.rel (0) target = $region49
    $region48: #{tpu_custom_call.1} parent=1 // pred_region
      _
    $region49: #{tpu_custom_call.1} parent=1 // pred_fallthru
      _
    // Predicated region
    $region50: #{tpu_custom_call.1} parent=1 // pred_check
      _
    $region51: #{tpu_custom_call.1} parent=1 // pred_check_branch
      %110 = sbr.rel (0) target = $region53
    $region52: #{tpu_custom_call.1} parent=1 // pred_region
      _
    $region53: #{tpu_custom_call.1} parent=1 // pred_fallthru
      _
    // Predicated region
    $region54: #{tpu_custom_call.1} parent=1 // pred_check
      _
    $region55: #{tpu_custom_call.1} parent=1 // pred_check_branch
      %112 = sbr.rel (0) target = $region57
    $region56: #{tpu_custom_call.1} parent=1 // pred_region
      _
    $region57: #{tpu_custom_call.1} parent=1 // pred_fallthru
      _
    // Predicated region
    $region58: #{tpu_custom_call.1} parent=1 // pred_check
      _
    $region59: #{tpu_custom_call.1} parent=1 // pred_check_branch
      %114 = sbr.rel (0) target = $region61
    $region60: #{tpu_custom_call.1} parent=1 // pred_region
      %116 = dma.done [#allocation4], 256
    $region61: #{tpu_custom_call.1} parent=1 // pred_fallthru
      _
    // Predicated region
    $region62: #{tpu_custom_call.1} parent=1 // pred_check
      _
    $region63: #{tpu_custom_call.1} parent=1 // pred_check_branch
      %118 = sbr.rel (0) target = $region65
    $region64: #{tpu_custom_call.1} parent=1 // pred_region
      %120 = dma.done [#allocation6], 16
    $region65: #{tpu_custom_call.1} parent=1 // pred_fallthru
      _
    // Predicated region
    $region66: #{tpu_custom_call.1} parent=1 // pred_check
      _
    $region67: #{tpu_custom_call.1} parent=1 // pred_check_branch
      %122 = sbr.rel (0) target = $region69
    $region68: #{tpu_custom_call.1} parent=1 // pred_region
      %124 = dma.done [#allocation6], 16
    $region69: #{tpu_custom_call.1} parent=1 // pred_fallthru
      _
    // Predicated region
    $region70: #{tpu_custom_call.1} parent=1 // pred_check
      _
    $region71: #{tpu_custom_call.1} parent=1 // pred_check_branch
      %126 = sbr.rel (0) target = $region73
    $region72: #{tpu_custom_call.1} parent=1 // pred_region
      %128 = dma.done [#allocation9], 256
    $region73: #{tpu_custom_call.1} parent=1 // pred_fallthru
      _
    // Predicated region
    $region74: #{tpu_custom_call.1} parent=1 // pred_check
      _
    $region75: #{tpu_custom_call.1} parent=1 // pred_check_branch
      %130 = sbr.rel (0) target = $region77
    $region76: #{tpu_custom_call.1} parent=1 // pred_region
      %132 = dma.done [#allocation9], 16
    $region77: #{tpu_custom_call.1} parent=1 // pred_fallthru
      _
    // Predicated region
    $region78: #{tpu_custom_call.1} parent=1 // pred_check
      _
    $region79: #{tpu_custom_call.1} parent=1 // pred_check_branch
      %134 = sbr.rel (0) target = $region81
    $region80: #{tpu_custom_call.1} parent=1 // pred_region
      %136 = dma.done [#allocation12], 2048
    $region81: #{tpu_custom_call.1} parent=1 // pred_fallthru
      _
    %v137 = vld [vmem:[%s0] sm:$0xff]
    %v138 = vld [vmem:[%s0 + $0x8] sm:$0xff]
    %v139 = vld [vmem:[#allocation3] sm:$0xff]
    %v140 = vld [vmem:[#allocation3 + $0x8] sm:$0xff]
    %v141 = vld [vmem:[#allocation5] sm:$0x1]
    %v143 = vperm.slane %v141, 0
    %vm145 = vcmask 130048
    %v147 = vsel %vm145, %v137, 0
    %v150 = vsel %vm145, %v138, 0
    %152 = vmatpush.msra.mxu0 0.0
    %153 = vmatpush.msra.mxu0 0.0
    %154 = vmatpush.msra.mxu0 0.0
    %155 = vmatpush.msra.mxu0 0.0
    %156 = vmatpush.msra.mxu0 0.0
    %157 = vmatpush.msra.mxu0 0.0
    %158 = vmatpush.msra.mxu0 0.0
    %159 = vmatpush.msra.mxu0 0.0
    %160 = vmatpush.msra.mxu0 0.0
    %161 = vmatpush.msra.mxu0 0.0
    %162 = vmatpush.msra.mxu0 0.0
    %163 = vmatpush.msra.mxu0 0.0
    %164 = vmatpush.msra.mxu0 0.0
    %165 = vmatpush.msra.mxu0 0.0
    %166 = vmatpush.msra.mxu0 %v140
    %167 = vmatpush.msra.mxu0 %v139
    %168 = vmatmul.f32.gmra.mxu0 %v147
    %v169 = vpop.f32.mrf.mxu0
    %v170 = vadd.f32 %v143, %v169
    %171 = vmatmul.f32.gmra.mxu0 %v150
    %v172 = vpop.f32.mrf.mxu0
    %v173 = vadd.f32 %v143, %v172
    %174 = vdwg.mxu0
    %v175 = vmax.f32 %v170, 0.0
    %v176 = vmax.f32 %v173, 0.0
    %v177 = vld [vmem:[%s3] sm:$0xff]
    %v178 = vld [vmem:[%s3 + $0x8] sm:$0xff]
    %v179 = vld [vmem:[%s3 + $0x10] sm:$0xff]
    %v180 = vld [vmem:[%s3 + $0x18] sm:$0xff]
    %v181 = vld [vmem:[#allocation7] sm:$0x1]
    %v183 = vperm.slane %v181, 0
    %vm185 = vcmask 261120
    %v187 = vsel %vm185, %v175, 0
    %v190 = vsel %vm185, %v176, 0
    %192 = vmatpush.msra.mxu0 0.0
    %193 = vmatpush.msra.mxu0 0.0
    %194 = vmatpush.msra.mxu0 0.0
    %195 = vmatpush.msra.mxu0 0.0
    %196 = vmatpush.msra.mxu0 0.0
    %197 = vmatpush.msra.mxu0 0.0
    %198 = vmatpush.msra.mxu0 0.0
    %199 = vmatpush.msra.mxu0 0.0
    %200 = vmatpush.msra.mxu0 0.0
    %201 = vmatpush.msra.mxu0 0.0
    %202 = vmatpush.msra.mxu0 0.0
    %203 = vmatpush.msra.mxu0 0.0
    %204 = vmatpush.msra.mxu0 %v180
    %205 = vmatpush.msra.mxu0 %v179
    %206 = vmatpush.msra.mxu0 %v178
    %207 = vmatpush.msra.mxu0 %v177
    %208 = vmatmul.f32.gmra.mxu0 %v187
    %v209 = vpop.f32.mrf.mxu0
    %v210 = vadd.f32 %v183, %v209
    %211 = vmatmul.f32.gmra.mxu0 %v190
    %v212 = vpop.f32.mrf.mxu0
    %v213 = vadd.f32 %v183, %v212
    %214 = vdwg.mxu0
    %v215 = vmax.f32 %v210, 0.0
    %v216 = vmax.f32 %v213, 0.0
    %v217 = vld [vmem:[#allocation8] sm:$0xff]
    %v218 = vld [vmem:[#allocation8 + $0x8] sm:$0xff]
    %v219 = vld [vmem:[#allocation10] sm:$0x1]
    %v221 = vperm.slane %v219, 0
    %v224 = vsel %vm145, %v215, 0
    %v227 = vsel %vm145, %v216, 0
    %229 = vmatpush.msra.mxu0 0.0
    %230 = vmatpush.msra.mxu0 0.0
    %231 = vmatpush.msra.mxu0 0.0
    %232 = vmatpush.msra.mxu0 0.0
    %233 = vmatpush.msra.mxu0 0.0
    %234 = vmatpush.msra.mxu0 0.0
    %235 = vmatpush.msra.mxu0 0.0
    %236 = vmatpush.msra.mxu0 0.0
    %237 = vmatpush.msra.mxu0 0.0
    %238 = vmatpush.msra.mxu0 0.0
    %239 = vmatpush.msra.mxu0 0.0
    %240 = vmatpush.msra.mxu0 0.0
    %241 = vmatpush.msra.mxu0 0.0
    %242 = vmatpush.msra.mxu0 0.0
    %243 = vmatpush.msra.mxu0 %v218
    %244 = vmatpush.msra.mxu0 %v217
    %245 = vmatmul.f32.gmra.mxu0 %v224
    %v246 = vpop.f32.mrf.mxu0
    %v247 = vadd.f32 %v221, %v246
    %248 = vmatmul.f32.gmra.mxu0 %v227
    %v249 = vpop.f32.mrf.mxu0
    %v250 = vadd.f32 %v221, %v249
    %251 = vdwg.mxu0
    %v252 = vld [vmem:[#allocation11] sm:$0xff]
    %v253 = vld [vmem:[#allocation11 + $0x8] sm:$0xff]
    %v254 = vld [vmem:[#allocation11 + $0x10] sm:$0xff]
    %v255 = vld [vmem:[#allocation11 + $0x18] sm:$0xff]
    %v256 = vld [vmem:[#allocation11 + $0x20] sm:$0xff]
    %v257 = vld [vmem:[#allocation11 + $0x28] sm:$0xff]
    %v258 = vld [vmem:[#allocation11 + $0x30] sm:$0xff]
    %v259 = vld [vmem:[#allocation11 + $0x38] sm:$0xff]
    %v260 = vld [vmem:[#allocation11 + $0x40] sm:$0xff]
    %v261 = vld [vmem:[#allocation11 + $0x48] sm:$0xff]
    %v262 = vld [vmem:[#allocation11 + $0x50] sm:$0xff]
    %v263 = vld [vmem:[#allocation11 + $0x58] sm:$0xff]
    %v264 = vld [vmem:[#allocation11 + $0x60] sm:$0xff]
    %v265 = vld [vmem:[#allocation11 + $0x68] sm:$0xff]
    %v266 = vld [vmem:[#allocation11 + $0x70] sm:$0xff]
    %v267 = vld [vmem:[#allocation11 + $0x78] sm:$0xff]
    %v268 = vld [vmem:[%s9] sm:$0x1]
    %v270 = vperm.slane %v268, 0
    %v272 = vlaneseq
    %v273 = vand.u32 %v272, 127
    %vm274 = vcmp.ge.s32.totalorder %v273, 64
    %vm275 = vcmp.lt.s32.totalorder %v273, 96
    %vm276 = vmand %vm274, %vm275
    %v277 = vld [vmem:[%s11] sm:$0x3]
    %s278 = scalar_lea.vmem %s10, 2
    %v279 = vld [vmem:[%s278] sm:$0x3]
    %s280 = scalar_lea.vmem %s11, 2
    %v281 = vld [vmem:[%s280] sm:$0x3]
    %v282 = vld [vmem:[%s10] sm:$0x3]
    %v283 = vld [vmem:[%s7] sm:$0xff]
    %v284 = vld [vmem:[%s7 + $0x8] sm:$0xff]
    %v285 = vld [vmem:[%s7 + $0x10] sm:$0xff]
    %v286 = vld [vmem:[%s7 + $0x18] sm:$0xff]
    %v288 = vsel %vm185, %v282, 0
    %290 = vmatpush.msra.mxu0 0.0
    %291 = vmatpush.msra.mxu0 0.0
    %292 = vmatpush.msra.mxu0 0.0
    %293 = vmatpush.msra.mxu0 0.0
    %294 = vmatpush.msra.mxu0 0.0
    %295 = vmatpush.msra.mxu0 0.0
    %296 = vmatpush.msra.mxu0 0.0
    %297 = vmatpush.msra.mxu0 0.0
    %298 = vmatpush.msra.mxu0 0.0
    %299 = vmatpush.msra.mxu0 0.0
    %300 = vmatpush.msra.mxu0 0.0
    %301 = vmatpush.msra.mxu0 0.0
    %302 = vmatpush.msra.mxu0 %v286
    %303 = vmatpush.msra.mxu0 %v285
    %304 = vmatpush.msra.mxu0 %v284
    %305 = vmatpush.msra.mxu0 %v283
    %306 = vmatmul.f32.gmra.mxu0 %v288
    %v307 = vpop.f32.mrf.mxu0
    %v308 = vadd.f32 0.0, %v307
    %309 = vdwg.mxu0
    %v310 = vadd.f32 %v247, %v308
    %v311 = vmul.f32 %v310, 0.5
    %v312 = vsel %vm276, %v310, %v311
    %v313 = vtanh.pop %v312
    %v314 = vadd.f32 %v313, 1.0
    %v315 = vmul.f32 %v314, 0.5
    %v316 = vsel %vm276, %v313, %v315
    %318 = vrot.lane.b32.xlu0 %v277, 32
    %v319 = vpop.permute.xlu0 %318
    %v321 = vmul.f32 %v316, %v319
    %323 = vrot.lane.b32.xlu0 %v316, 64
    %v324 = vpop.permute.xlu0 %323
    %v326 = vmul.f32 %v316, %v324
    %328 = vrot.lane.b32.xlu0 %v326, 32
    %v329 = vpop.permute.xlu0 %328
    %v331 = vadd.f32 %v321, %v329
    %v332 = vtanh.pop %v331
    %334 = vrot.lane.b32.xlu0 %v332, 64
    %v335 = vpop.permute.xlu0 %334
    %v337 = vmul.f32 %v316, %v335
    %339 = vrot.lane.b32.xlu0 %v337, 32
    %v340 = vpop.permute.xlu0 %339
    %343 = vrot.lane.b32.xlu0 %v279, 32
    %v344 = vpop.permute.xlu0 %343
    %v346 = vsel %vm185, %v340, %v344
    %vm347 = vcmask 523264
    %v349 = vsel %vm347, %v346, 0
    %351 = vmatpush.msra.mxu0 0.0
    %352 = vmatpush.msra.mxu0 0.0
    %353 = vmatpush.msra.mxu0 0.0
    %354 = vmatpush.msra.mxu0 0.0
    %355 = vmatpush.msra.mxu0 0.0
    %356 = vmatpush.msra.mxu0 0.0
    %357 = vmatpush.msra.mxu0 0.0
    %358 = vmatpush.msra.mxu0 0.0
    %359 = vmatpush.msra.mxu0 %v266
    %360 = vmatpush.msra.mxu0 %v264
    %361 = vmatpush.msra.mxu0 %v262
    %362 = vmatpush.msra.mxu0 %v260
    %363 = vmatpush.msra.mxu0 %v258
    %364 = vmatpush.msra.mxu0 %v256
    %365 = vmatpush.msra.mxu0 %v254
    %366 = vmatpush.msra.mxu0 %v252
    %367 = vmatmul.f32.gmra.mxu0 %v349
    %v368 = vpop.f32.mrf.mxu0
    %v369 = vadd.f32 0.0, %v368
    %370 = vdwg.mxu0
    %371 = vmatpush.msra.mxu0 0.0
    %372 = vmatpush.msra.mxu0 0.0
    %373 = vmatpush.msra.mxu0 0.0
    %374 = vmatpush.msra.mxu0 0.0
    %375 = vmatpush.msra.mxu0 0.0
    %376 = vmatpush.msra.mxu0 0.0
    %377 = vmatpush.msra.mxu0 0.0
    %378 = vmatpush.msra.mxu0 0.0
    %379 = vmatpush.msra.mxu0 %v267
    %380 = vmatpush.msra.mxu0 %v265
    %381 = vmatpush.msra.mxu0 %v263
    %382 = vmatpush.msra.mxu0 %v261
    %383 = vmatpush.msra.mxu0 %v259
    %384 = vmatpush.msra.mxu0 %v257
    %385 = vmatpush.msra.mxu0 %v255
    %386 = vmatpush.msra.mxu0 %v253
    %387 = vmatmul.f32.gmra.mxu0 %v349
    %v388 = vpop.f32.mrf.mxu0
    %v389 = vadd.f32 0.0, %v388
    %390 = vdwg.mxu0
    %v391 = vadd.f32 %v389, %v270
    %v392 = vmul.f32 %v391, 0.5
    %v393 = vsel %vm276, %v391, %v392
    %v394 = vtanh.pop %v393
    %v395 = vadd.f32 %v394, 1.0
    %v396 = vmul.f32 %v395, 0.5
    %v397 = vsel %vm276, %v394, %v396
    %399 = vrot.lane.b32.xlu0 %v281, 32
    %v400 = vpop.permute.xlu0 %399
    %v402 = vmul.f32 %v397, %v400
    %404 = vrot.lane.b32.xlu0 %v397, 64
    %v405 = vpop.permute.xlu0 %404
    %v407 = vmul.f32 %v397, %v405
    %409 = vrot.lane.b32.xlu0 %v407, 32
    %v410 = vpop.permute.xlu0 %409
    %v412 = vadd.f32 %v402, %v410
    %v413 = vtanh.pop %v412
    %415 = vrot.lane.b32.xlu0 %v413, 64
    %v416 = vpop.permute.xlu0 %415
    %v418 = vmul.f32 %v397, %v416
    %v420 = vrot.slane %v369, 6
    %v422 = vadd.f32 %v247, %v420
    %v423 = vmul.f32 %v422, 0.5
    %v424 = vsel %vm276, %v422, %v423
    %v425 = vtanh.pop %v424
    %v426 = vadd.f32 %v425, 1.0
    %v427 = vmul.f32 %v426, 0.5
    %v428 = vsel %vm276, %v425, %v427
    %v430 = vrot.slane %v331, 6
    %v432 = vmul.f32 %v428, %v430
    %434 = vrot.lane.b32.xlu0 %v428, 64
    %v435 = vpop.permute.xlu0 %434
    %v437 = vmul.f32 %v428, %v435
    %439 = vrot.lane.b32.xlu0 %v437, 32
    %v440 = vpop.permute.xlu0 %439
    %v442 = vadd.f32 %v432, %v440
    %v443 = vtanh.pop %v442
    %445 = vrot.lane.b32.xlu0 %v443, 64
    %v446 = vpop.permute.xlu0 %445
    %v448 = vmul.f32 %v428, %v446
    %450 = vrot.lane.b32.xlu0 %v448, 32
    %v451 = vpop.permute.xlu0 %450
    %v454 = vrot.slane %v418, 6
    %455 = vrot.lane.b32.xlu0 %v454, 64
    %v456 = vpop.permute.xlu0 %455
    %v458 = vsel %vm185, %v451, %v456
    %v460 = vrot.slane %v458, 2
    %v461 = vsel %vm347, %v460, 0
    %463 = vmatpush.msra.mxu0 0.0
    %464 = vmatpush.msra.mxu0 0.0
    %465 = vmatpush.msra.mxu0 0.0
    %466 = vmatpush.msra.mxu0 0.0
    %467 = vmatpush.msra.mxu0 0.0
    %468 = vmatpush.msra.mxu0 0.0
    %469 = vmatpush.msra.mxu0 0.0
    %470 = vmatpush.msra.mxu0 0.0
    %471 = vmatpush.msra.mxu0 %v266
    %472 = vmatpush.msra.mxu0 %v264
    %473 = vmatpush.msra.mxu0 %v262
    %474 = vmatpush.msra.mxu0 %v260
    %475 = vmatpush.msra.mxu0 %v258
    %476 = vmatpush.msra.mxu0 %v256
    %477 = vmatpush.msra.mxu0 %v254
    %478 = vmatpush.msra.mxu0 %v252
    %479 = vmatmul.f32.gmra.mxu0 %v461
    %v480 = vpop.f32.mrf.mxu0
    %v481 = vadd.f32 0.0, %v480
    %482 = vdwg.mxu0
    %483 = vmatpush.msra.mxu0 0.0
    %484 = vmatpush.msra.mxu0 0.0
    %485 = vmatpush.msra.mxu0 0.0
    %486 = vmatpush.msra.mxu0 0.0
    %487 = vmatpush.msra.mxu0 0.0
    %488 = vmatpush.msra.mxu0 0.0
    %489 = vmatpush.msra.mxu0 0.0
    %490 = vmatpush.msra.mxu0 0.0
    %491 = vmatpush.msra.mxu0 %v267
    %492 = vmatpush.msra.mxu0 %v265
    %493 = vmatpush.msra.mxu0 %v263
    %494 = vmatpush.msra.mxu0 %v261
    %495 = vmatpush.msra.mxu0 %v259
    %496 = vmatpush.msra.mxu0 %v257
    %497 = vmatpush.msra.mxu0 %v255
    %498 = vmatpush.msra.mxu0 %v253
    %499 = vmatmul.f32.gmra.mxu0 %v461
    %v500 = vpop.f32.mrf.mxu0
    %v501 = vadd.f32 0.0, %v500
    %502 = vdwg.mxu0
    %v503 = vadd.f32 %v501, %v270
    %v504 = vmul.f32 %v503, 0.5
    %v505 = vsel %vm276, %v503, %v504
    %v506 = vtanh.pop %v505
    %v507 = vadd.f32 %v506, 1.0
    %v508 = vmul.f32 %v507, 0.5
    %v509 = vsel %vm276, %v506, %v508
    %v510 = vmul.f32 %v509, %v412
    %512 = vrot.lane.b32.xlu0 %v509, 64
    %v513 = vpop.permute.xlu0 %512
    %v515 = vmul.f32 %v509, %v513
    %517 = vrot.lane.b32.xlu0 %v515, 32
    %v518 = vpop.permute.xlu0 %517
    %v520 = vadd.f32 %v510, %v518
    %v521 = vtanh.pop %v520
    %523 = vrot.lane.b32.xlu0 %v521, 64
    %v524 = vpop.permute.xlu0 %523
    %v526 = vmul.f32 %v509, %v524
    %v528 = vrot.slane %v481, 4
    %v530 = vadd.f32 %v247, %v528
    %v531 = vmul.f32 %v530, 0.5
    %v532 = vsel %vm276, %v530, %v531
    %v533 = vtanh.pop %v532
    %v534 = vadd.f32 %v533, 1.0
    %v535 = vmul.f32 %v534, 0.5
    %v536 = vsel %vm276, %v533, %v535
    %v538 = vrot.slane %v442, 6
    %v540 = vmul.f32 %v536, %v538
    %542 = vrot.lane.b32.xlu0 %v536, 64
    %v543 = vpop.permute.xlu0 %542
    %v545 = vmul.f32 %v536, %v543
    %547 = vrot.lane.b32.xlu0 %v545, 32
    %v548 = vpop.permute.xlu0 %547
    %v550 = vadd.f32 %v540, %v548
    %v551 = vtanh.pop %v550
    %553 = vrot.lane.b32.xlu0 %v551, 64
    %v554 = vpop.permute.xlu0 %553
    %v556 = vmul.f32 %v536, %v554
    %558 = vrot.lane.b32.xlu0 %v556, 32
    %v559 = vpop.permute.xlu0 %558
    %v562 = vrot.slane %v526, 4
    %563 = vrot.lane.b32.xlu0 %v562, 64
    %v564 = vpop.permute.xlu0 %563
    %v566 = vsel %vm185, %v559, %v564
    %v568 = vrot.slane %v566, 4
    %v569 = vsel %vm347, %v568, 0
    %571 = vmatpush.msra.mxu0 0.0
    %572 = vmatpush.msra.mxu0 0.0
    %573 = vmatpush.msra.mxu0 0.0
    %574 = vmatpush.msra.mxu0 0.0
    %575 = vmatpush.msra.mxu0 0.0
    %576 = vmatpush.msra.mxu0 0.0
    %577 = vmatpush.msra.mxu0 0.0
    %578 = vmatpush.msra.mxu0 0.0
    %579 = vmatpush.msra.mxu0 %v266
    %580 = vmatpush.msra.mxu0 %v264
    %581 = vmatpush.msra.mxu0 %v262
    %582 = vmatpush.msra.mxu0 %v260
    %583 = vmatpush.msra.mxu0 %v258
    %584 = vmatpush.msra.mxu0 %v256
    %585 = vmatpush.msra.mxu0 %v254
    %586 = vmatpush.msra.mxu0 %v252
    %587 = vmatmul.f32.gmra.mxu0 %v569
    %v588 = vpop.f32.mrf.mxu0
    %v589 = vadd.f32 0.0, %v588
    %590 = vdwg.mxu0
    %591 = vmatpush.msra.mxu0 0.0
    %592 = vmatpush.msra.mxu0 0.0
    %593 = vmatpush.msra.mxu0 0.0
    %594 = vmatpush.msra.mxu0 0.0
    %595 = vmatpush.msra.mxu0 0.0
    %596 = vmatpush.msra.mxu0 0.0
    %597 = vmatpush.msra.mxu0 0.0
    %598 = vmatpush.msra.mxu0 0.0
    %599 = vmatpush.msra.mxu0 %v267
    %600 = vmatpush.msra.mxu0 %v265
    %601 = vmatpush.msra.mxu0 %v263
    %602 = vmatpush.msra.mxu0 %v261
    %603 = vmatpush.msra.mxu0 %v259
    %604 = vmatpush.msra.mxu0 %v257
    %605 = vmatpush.msra.mxu0 %v255
    %606 = vmatpush.msra.mxu0 %v253
    %607 = vmatmul.f32.gmra.mxu0 %v569
    %v608 = vpop.f32.mrf.mxu0
    %v609 = vadd.f32 0.0, %v608
    %610 = vdwg.mxu0
    %v611 = vadd.f32 %v609, %v270
    %v612 = vmul.f32 %v611, 0.5
    %v613 = vsel %vm276, %v611, %v612
    %v614 = vtanh.pop %v613
    %v615 = vadd.f32 %v614, 1.0
    %v616 = vmul.f32 %v615, 0.5
    %v617 = vsel %vm276, %v614, %v616
    %v618 = vmul.f32 %v617, %v520
    %620 = vrot.lane.b32.xlu0 %v617, 64
    %v621 = vpop.permute.xlu0 %620
    %v623 = vmul.f32 %v617, %v621
    %625 = vrot.lane.b32.xlu0 %v623, 32
    %v626 = vpop.permute.xlu0 %625
    %v628 = vadd.f32 %v618, %v626
    %v629 = vtanh.pop %v628
    %631 = vrot.lane.b32.xlu0 %v629, 64
    %v632 = vpop.permute.xlu0 %631
    %v634 = vmul.f32 %v617, %v632
    %v636 = vrot.slane %v589, 2
    %v638 = vadd.f32 %v247, %v636
    %v639 = vmul.f32 %v638, 0.5
    %v640 = vsel %vm276, %v638, %v639
    %v641 = vtanh.pop %v640
    %v642 = vadd.f32 %v641, 1.0
    %v643 = vmul.f32 %v642, 0.5
    %v644 = vsel %vm276, %v641, %v643
    %v646 = vrot.slane %v550, 6
    %v648 = vmul.f32 %v644, %v646
    %650 = vrot.lane.b32.xlu0 %v644, 64
    %v651 = vpop.permute.xlu0 %650
    %v653 = vmul.f32 %v644, %v651
    %655 = vrot.lane.b32.xlu0 %v653, 32
    %v656 = vpop.permute.xlu0 %655
    %v658 = vadd.f32 %v648, %v656
    %v659 = vtanh.pop %v658
    %661 = vrot.lane.b32.xlu0 %v659, 64
    %v662 = vpop.permute.xlu0 %661
    %v664 = vmul.f32 %v644, %v662
    %666 = vrot.lane.b32.xlu0 %v664, 32
    %v667 = vpop.permute.xlu0 %666
    %v670 = vrot.slane %v634, 2
    %671 = vrot.lane.b32.xlu0 %v670, 64
    %v672 = vpop.permute.xlu0 %671
    %v674 = vsel %vm185, %v667, %v672
    %v676 = vrot.slane %v674, 6
    %v677 = vsel %vm347, %v676, 0
    %679 = vmatpush.msra.mxu0 0.0
    %680 = vmatpush.msra.mxu0 0.0
    %681 = vmatpush.msra.mxu0 0.0
    %682 = vmatpush.msra.mxu0 0.0
    %683 = vmatpush.msra.mxu0 0.0
    %684 = vmatpush.msra.mxu0 0.0
    %685 = vmatpush.msra.mxu0 0.0
    %686 = vmatpush.msra.mxu0 0.0
    %687 = vmatpush.msra.mxu0 %v266
    %688 = vmatpush.msra.mxu0 %v264
    %689 = vmatpush.msra.mxu0 %v262
    %690 = vmatpush.msra.mxu0 %v260
    %691 = vmatpush.msra.mxu0 %v258
    %692 = vmatpush.msra.mxu0 %v256
    %693 = vmatpush.msra.mxu0 %v254
    %694 = vmatpush.msra.mxu0 %v252
    %695 = vmatmul.f32.gmra.mxu0 %v677
    %v696 = vpop.f32.mrf.mxu0
    %v697 = vadd.f32 0.0, %v696
    %698 = vdwg.mxu0
    %699 = vmatpush.msra.mxu0 0.0
    %700 = vmatpush.msra.mxu0 0.0
    %701 = vmatpush.msra.mxu0 0.0
    %702 = vmatpush.msra.mxu0 0.0
    %703 = vmatpush.msra.mxu0 0.0
    %704 = vmatpush.msra.mxu0 0.0
    %705 = vmatpush.msra.mxu0 0.0
    %706 = vmatpush.msra.mxu0 0.0
    %707 = vmatpush.msra.mxu0 %v267
    %708 = vmatpush.msra.mxu0 %v265
    %709 = vmatpush.msra.mxu0 %v263
    %710 = vmatpush.msra.mxu0 %v261
    %711 = vmatpush.msra.mxu0 %v259
    %712 = vmatpush.msra.mxu0 %v257
    %713 = vmatpush.msra.mxu0 %v255
    %714 = vmatpush.msra.mxu0 %v253
    %715 = vmatmul.f32.gmra.mxu0 %v677
    %v716 = vpop.f32.mrf.mxu0
    %v717 = vadd.f32 0.0, %v716
    %718 = vdwg.mxu0
    %v719 = vadd.f32 %v717, %v270
    %v720 = vmul.f32 %v719, 0.5
    %v721 = vsel %vm276, %v719, %v720
    %v722 = vtanh.pop %v721
    %v723 = vadd.f32 %v722, 1.0
    %v724 = vmul.f32 %v723, 0.5
    %v725 = vsel %vm276, %v722, %v724
    %v726 = vmul.f32 %v725, %v628
    %728 = vrot.lane.b32.xlu0 %v725, 64
    %v729 = vpop.permute.xlu0 %728
    %v731 = vmul.f32 %v725, %v729
    %733 = vrot.lane.b32.xlu0 %v731, 32
    %v734 = vpop.permute.xlu0 %733
    %v736 = vadd.f32 %v726, %v734
    %v737 = vtanh.pop %v736
    %739 = vrot.lane.b32.xlu0 %v737, 64
    %v740 = vpop.permute.xlu0 %739
    %v742 = vmul.f32 %v725, %v740
    %v743 = vadd.f32 %v250, %v697
    %v744 = vmul.f32 %v743, 0.5
    %v745 = vsel %vm276, %v743, %v744
    %v746 = vtanh.pop %v745
    %v747 = vadd.f32 %v746, 1.0
    %v748 = vmul.f32 %v747, 0.5
    %v749 = vsel %vm276, %v746, %v748
    %v751 = vrot.slane %v658, 6
    %v753 = vmul.f32 %v749, %v751
    %755 = vrot.lane.b32.xlu0 %v749, 64
    %v756 = vpop.permute.xlu0 %755
    %v758 = vmul.f32 %v749, %v756
    %760 = vrot.lane.b32.xlu0 %v758, 32
    %v761 = vpop.permute.xlu0 %760
    %v763 = vadd.f32 %v753, %v761
    %v764 = vtanh.pop %v763
    %766 = vrot.lane.b32.xlu0 %v764, 64
    %v767 = vpop.permute.xlu0 %766
    %v769 = vmul.f32 %v749, %v767
    %771 = vrot.lane.b32.xlu0 %v769, 32
    %v772 = vpop.permute.xlu0 %771
    %775 = vrot.lane.b32.xlu0 %v742, 64
    %v776 = vpop.permute.xlu0 %775
    %v778 = vsel %vm185, %v772, %v776
    %v780 = vsel %vm347, %v778, 0
    %782 = vmatpush.msra.mxu0 0.0
    %783 = vmatpush.msra.mxu0 0.0
    %784 = vmatpush.msra.mxu0 0.0
    %785 = vmatpush.msra.mxu0 0.0
    %786 = vmatpush.msra.mxu0 0.0
    %787 = vmatpush.msra.mxu0 0.0
    %788 = vmatpush.msra.mxu0 0.0
    %789 = vmatpush.msra.mxu0 0.0
    %790 = vmatpush.msra.mxu0 %v266
    %791 = vmatpush.msra.mxu0 %v264
    %792 = vmatpush.msra.mxu0 %v262
    %793 = vmatpush.msra.mxu0 %v260
    %794 = vmatpush.msra.mxu0 %v258
    %795 = vmatpush.msra.mxu0 %v256
    %796 = vmatpush.msra.mxu0 %v254
    %797 = vmatpush.msra.mxu0 %v252
    %798 = vmatmul.f32.gmra.mxu0 %v780
    %v799 = vpop.f32.mrf.mxu0
    %v800 = vadd.f32 0.0, %v799
    %801 = vdwg.mxu0
    %802 = vmatpush.msra.mxu0 0.0
    %803 = vmatpush.msra.mxu0 0.0
    %804 = vmatpush.msra.mxu0 0.0
    %805 = vmatpush.msra.mxu0 0.0
    %806 = vmatpush.msra.mxu0 0.0
    %807 = vmatpush.msra.mxu0 0.0
    %808 = vmatpush.msra.mxu0 0.0
    %809 = vmatpush.msra.mxu0 0.0
    %810 = vmatpush.msra.mxu0 %v267
    %811 = vmatpush.msra.mxu0 %v265
    %812 = vmatpush.msra.mxu0 %v263
    %813 = vmatpush.msra.mxu0 %v261
    %814 = vmatpush.msra.mxu0 %v259
    %815 = vmatpush.msra.mxu0 %v257
    %816 = vmatpush.msra.mxu0 %v255
    %817 = vmatpush.msra.mxu0 %v253
    %818 = vmatmul.f32.gmra.mxu0 %v780
    %v819 = vpop.f32.mrf.mxu0
    %v820 = vadd.f32 0.0, %v819
    %821 = vdwg.mxu0
    %v822 = vadd.f32 %v820, %v270
    %v823 = vmul.f32 %v822, 0.5
    %v824 = vsel %vm276, %v822, %v823
    %v825 = vtanh.pop %v824
    %v826 = vadd.f32 %v825, 1.0
    %v827 = vmul.f32 %v826, 0.5
    %v828 = vsel %vm276, %v825, %v827
    %v829 = vmul.f32 %v828, %v736
    %831 = vrot.lane.b32.xlu0 %v828, 64
    %v832 = vpop.permute.xlu0 %831
    %v834 = vmul.f32 %v828, %v832
    %836 = vrot.lane.b32.xlu0 %v834, 32
    %v837 = vpop.permute.xlu0 %836
    %v839 = vadd.f32 %v829, %v837
    %v840 = vtanh.pop %v839
    %842 = vrot.lane.b32.xlu0 %v840, 64
    %v843 = vpop.permute.xlu0 %842
    %v845 = vmul.f32 %v828, %v843
    %v847 = vrot.slane %v800, 6
    %v849 = vadd.f32 %v250, %v847
    %v850 = vmul.f32 %v849, 0.5
    %v851 = vsel %vm276, %v849, %v850
    %v852 = vtanh.pop %v851
    %v853 = vadd.f32 %v852, 1.0
    %v854 = vmul.f32 %v853, 0.5
    %v855 = vsel %vm276, %v852, %v854
    %v857 = vrot.slane %v763, 6
    %v859 = vmul.f32 %v855, %v857
    %861 = vrot.lane.b32.xlu0 %v855, 64
    %v862 = vpop.permute.xlu0 %861
    %v864 = vmul.f32 %v855, %v862
    %866 = vrot.lane.b32.xlu0 %v864, 32
    %v867 = vpop.permute.xlu0 %866
    %v869 = vadd.f32 %v859, %v867
    %v870 = vtanh.pop %v869
    %872 = vrot.lane.b32.xlu0 %v870, 64
    %v873 = vpop.permute.xlu0 %872
    %v875 = vmul.f32 %v855, %v873
    %877 = vrot.lane.b32.xlu0 %v875, 32
    %v878 = vpop.permute.xlu0 %877
    %v881 = vrot.slane %v845, 6
    %882 = vrot.lane.b32.xlu0 %v881, 64
    %v883 = vpop.permute.xlu0 %882
    %v885 = vsel %vm185, %v878, %v883
    %v887 = vrot.slane %v885, 2
    %v888 = vsel %vm347, %v887, 0
    %890 = vmatpush.msra.mxu0 0.0
    %891 = vmatpush.msra.mxu0 0.0
    %892 = vmatpush.msra.mxu0 0.0
    %893 = vmatpush.msra.mxu0 0.0
    %894 = vmatpush.msra.mxu0 0.0
    %895 = vmatpush.msra.mxu0 0.0
    %896 = vmatpush.msra.mxu0 0.0
    %897 = vmatpush.msra.mxu0 0.0
    %898 = vmatpush.msra.mxu0 %v266
    %899 = vmatpush.msra.mxu0 %v264
    %900 = vmatpush.msra.mxu0 %v262
    %901 = vmatpush.msra.mxu0 %v260
    %902 = vmatpush.msra.mxu0 %v258
    %903 = vmatpush.msra.mxu0 %v256
    %904 = vmatpush.msra.mxu0 %v254
    %905 = vmatpush.msra.mxu0 %v252
    %906 = vmatmul.f32.gmra.mxu0 %v888
    %v907 = vpop.f32.mrf.mxu0
    %v908 = vadd.f32 0.0, %v907
    %909 = vdwg.mxu0
    %910 = vmatpush.msra.mxu0 0.0
    %911 = vmatpush.msra.mxu0 0.0
    %912 = vmatpush.msra.mxu0 0.0
    %913 = vmatpush.msra.mxu0 0.0
    %914 = vmatpush.msra.mxu0 0.0
    %915 = vmatpush.msra.mxu0 0.0
    %916 = vmatpush.msra.mxu0 0.0
    %917 = vmatpush.msra.mxu0 0.0
    %918 = vmatpush.msra.mxu0 %v267
    %919 = vmatpush.msra.mxu0 %v265
    %920 = vmatpush.msra.mxu0 %v263
    %921 = vmatpush.msra.mxu0 %v261
    %922 = vmatpush.msra.mxu0 %v259
    %923 = vmatpush.msra.mxu0 %v257
    %924 = vmatpush.msra.mxu0 %v255
    %925 = vmatpush.msra.mxu0 %v253
    %926 = vmatmul.f32.gmra.mxu0 %v888
    %v927 = vpop.f32.mrf.mxu0
    %v928 = vadd.f32 0.0, %v927
    %929 = vdwg.mxu0
    %v930 = vadd.f32 %v928, %v270
    %v931 = vmul.f32 %v930, 0.5
    %v932 = vsel %vm276, %v930, %v931
    %v933 = vtanh.pop %v932
    %v934 = vadd.f32 %v933, 1.0
    %v935 = vmul.f32 %v934, 0.5
    %v936 = vsel %vm276, %v933, %v935
    %v937 = vmul.f32 %v936, %v839
    %939 = vrot.lane.b32.xlu0 %v936, 64
    %v940 = vpop.permute.xlu0 %939
    %v942 = vmul.f32 %v936, %v940
    %944 = vrot.lane.b32.xlu0 %v942, 32
    %v945 = vpop.permute.xlu0 %944
    %v947 = vadd.f32 %v937, %v945
    %v948 = vtanh.pop %v947
    %950 = vrot.lane.b32.xlu0 %v948, 64
    %v951 = vpop.permute.xlu0 %950
    %v953 = vmul.f32 %v936, %v951
    %v955 = vrot.slane %v908, 4
    %v957 = vadd.f32 %v250, %v955
    %v958 = vmul.f32 %v957, 0.5
    %v959 = vsel %vm276, %v957, %v958
    %v960 = vtanh.pop %v959
    %v961 = vadd.f32 %v960, 1.0
    %v962 = vmul.f32 %v961, 0.5
    %v963 = vsel %vm276, %v960, %v962
    %v965 = vrot.slane %v869, 6
    %v967 = vmul.f32 %v963, %v965
    %969 = vrot.lane.b32.xlu0 %v963, 64
    %v970 = vpop.permute.xlu0 %969
    %v972 = vmul.f32 %v963, %v970
    %974 = vrot.lane.b32.xlu0 %v972, 32
    %v975 = vpop.permute.xlu0 %974
    %v977 = vadd.f32 %v967, %v975
    %v978 = vtanh.pop %v977
    %980 = vrot.lane.b32.xlu0 %v978, 64
    %v981 = vpop.permute.xlu0 %980
    %v983 = vmul.f32 %v963, %v981
    %985 = vrot.lane.b32.xlu0 %v983, 32
    %v986 = vpop.permute.xlu0 %985
    %v989 = vrot.slane %v953, 4
    %990 = vrot.lane.b32.xlu0 %v989, 64
    %v991 = vpop.permute.xlu0 %990
    %v993 = vsel %vm185, %v986, %v991
    %v995 = vrot.slane %v993, 4
    %v996 = vsel %vm347, %v995, 0
    %998 = vmatpush.msra.mxu0 0.0
    %999 = vmatpush.msra.mxu0 0.0
    %1000 = vmatpush.msra.mxu0 0.0
    %1001 = vmatpush.msra.mxu0 0.0
    %1002 = vmatpush.msra.mxu0 0.0
    %1003 = vmatpush.msra.mxu0 0.0
    %1004 = vmatpush.msra.mxu0 0.0
    %1005 = vmatpush.msra.mxu0 0.0
    %1006 = vmatpush.msra.mxu0 %v266
    %1007 = vmatpush.msra.mxu0 %v264
    %1008 = vmatpush.msra.mxu0 %v262
    %1009 = vmatpush.msra.mxu0 %v260
    %1010 = vmatpush.msra.mxu0 %v258
    %1011 = vmatpush.msra.mxu0 %v256
    %1012 = vmatpush.msra.mxu0 %v254
    %1013 = vmatpush.msra.mxu0 %v252
    %1014 = vmatmul.f32.gmra.mxu0 %v996
    %v1015 = vpop.f32.mrf.mxu0
    %v1016 = vadd.f32 0.0, %v1015
    %1017 = vdwg.mxu0
    %1018 = vmatpush.msra.mxu0 0.0
    %1019 = vmatpush.msra.mxu0 0.0
    %1020 = vmatpush.msra.mxu0 0.0
    %1021 = vmatpush.msra.mxu0 0.0
    %1022 = vmatpush.msra.mxu0 0.0
    %1023 = vmatpush.msra.mxu0 0.0
    %1024 = vmatpush.msra.mxu0 0.0
    %1025 = vmatpush.msra.mxu0 0.0
    %1026 = vmatpush.msra.mxu0 %v267
    %1027 = vmatpush.msra.mxu0 %v265
    %1028 = vmatpush.msra.mxu0 %v263
    %1029 = vmatpush.msra.mxu0 %v261
    %1030 = vmatpush.msra.mxu0 %v259
    %1031 = vmatpush.msra.mxu0 %v257
    %1032 = vmatpush.msra.mxu0 %v255
    %1033 = vmatpush.msra.mxu0 %v253
    %1034 = vmatmul.f32.gmra.mxu0 %v996
    %v1035 = vpop.f32.mrf.mxu0
    %v1036 = vadd.f32 0.0, %v1035
    %1037 = vdwg.mxu0
    %v1038 = vadd.f32 %v1036, %v270
    %v1039 = vmul.f32 %v1038, 0.5
    %v1040 = vsel %vm276, %v1038, %v1039
    %v1041 = vtanh.pop %v1040
    %v1042 = vadd.f32 %v1041, 1.0
    %v1043 = vmul.f32 %v1042, 0.5
    %v1044 = vsel %vm276, %v1041, %v1043
    %v1045 = vmul.f32 %v1044, %v947
    %1047 = vrot.lane.b32.xlu0 %v1044, 64
    %v1048 = vpop.permute.xlu0 %1047
    %v1050 = vmul.f32 %v1044, %v1048
    %1052 = vrot.lane.b32.xlu0 %v1050, 32
    %v1053 = vpop.permute.xlu0 %1052
    %v1055 = vadd.f32 %v1045, %v1053
    %v1056 = vtanh.pop %v1055
    %1058 = vrot.lane.b32.xlu0 %v1056, 64
    %v1059 = vpop.permute.xlu0 %1058
    %v1061 = vmul.f32 %v1044, %v1059
    %v1063 = vrot.slane %v1016, 2
    %v1065 = vadd.f32 %v250, %v1063
    %v1066 = vmul.f32 %v1065, 0.5
    %v1067 = vsel %vm276, %v1065, %v1066
    %v1068 = vtanh.pop %v1067
    %v1069 = vadd.f32 %v1068, 1.0
    %v1070 = vmul.f32 %v1069, 0.5
    %v1071 = vsel %vm276, %v1068, %v1070
    %v1073 = vrot.slane %v977, 6
    %v1075 = vmul.f32 %v1071, %v1073
    %1077 = vrot.lane.b32.xlu0 %v1071, 64
    %v1078 = vpop.permute.xlu0 %1077
    %v1080 = vmul.f32 %v1071, %v1078
    %1082 = vrot.lane.b32.xlu0 %v1080, 32
    %v1083 = vpop.permute.xlu0 %1082
    %v1085 = vadd.f32 %v1075, %v1083
    %v1086 = vtanh.pop %v1085
    %1088 = vrot.lane.b32.xlu0 %v1086, 64
    %v1089 = vpop.permute.xlu0 %1088
    %v1091 = vmul.f32 %v1071, %v1089
    %1093 = vrot.lane.b32.xlu0 %v1091, 32
    %v1094 = vpop.permute.xlu0 %1093
    %v1097 = vrot.slane %v1061, 2
    %1098 = vrot.lane.b32.xlu0 %v1097, 64
    %v1099 = vpop.permute.xlu0 %1098
    %v1101 = vsel %vm185, %v1094, %v1099
    %v1103 = vrot.slane %v1101, 6
    %v1104 = vsel %vm347, %v1103, 0
    %1106 = vmatpush.msra.mxu0 0.0
    %1107 = vmatpush.msra.mxu0 0.0
    %1108 = vmatpush.msra.mxu0 0.0
    %1109 = vmatpush.msra.mxu0 0.0
    %1110 = vmatpush.msra.mxu0 0.0
    %1111 = vmatpush.msra.mxu0 0.0
    %1112 = vmatpush.msra.mxu0 0.0
    %1113 = vmatpush.msra.mxu0 0.0
    %1114 = vmatpush.msra.mxu0 %v267
    %1115 = vmatpush.msra.mxu0 %v265
    %1116 = vmatpush.msra.mxu0 %v263
    %1117 = vmatpush.msra.mxu0 %v261
    %1118 = vmatpush.msra.mxu0 %v259
    %1119 = vmatpush.msra.mxu0 %v257
    %1120 = vmatpush.msra.mxu0 %v255
    %1121 = vmatpush.msra.mxu0 %v253
    %1122 = vmatmul.f32.gmra.mxu0 %v1104
    %v1123 = vpop.f32.mrf.mxu0
    %v1124 = vadd.f32 0.0, %v1123
    %1125 = vdwg.mxu0
    %v1126 = vadd.f32 %v1124, %v270
    %v1127 = vmul.f32 %v1126, 0.5
    %v1128 = vsel %vm276, %v1126, %v1127
    %v1129 = vtanh.pop %v1128
    %v1130 = vadd.f32 %v1129, 1.0
    %v1131 = vmul.f32 %v1130, 0.5
    %v1132 = vsel %vm276, %v1129, %v1131
    %v1133 = vmul.f32 %v1132, %v1055
    %1135 = vrot.lane.b32.xlu0 %v1132, 64
    %v1136 = vpop.permute.xlu0 %1135
    %v1138 = vmul.f32 %v1132, %v1136
    %1140 = vrot.lane.b32.xlu0 %v1138, 32
    %v1141 = vpop.permute.xlu0 %1140
    %v1143 = vadd.f32 %v1133, %v1141
    %v1144 = vtanh.pop %v1143
    %1146 = vrot.lane.b32.xlu0 %v1144, 64
    %v1147 = vpop.permute.xlu0 %1146
    %v1149 = vmul.f32 %v1132, %v1147
    %v1150 = vrot.slane %v526, 6
    %v1152 = vrot.slane %v634, 4
    %v1154 = vrot.slane %v742, 2
    %v1156 = vrot.slane %v953, 6
    %v1158 = vrot.slane %v1061, 4
    %v1161 = vrot.slane %v1149, 2
    %vm1163 = vcmask 1041408
    %v1164 = vsel %vm1163, %v418, %v1150
    %vm1165 = vcmask 1043456
    %v1166 = vsel %vm1165, %v1164, %v1152
    %vm1167 = vcmask 1045504
    %v1168 = vsel %vm1167, %v1166, %v1154
    %v1169 = vsel %vm1163, %v845, %v1156
    %v1170 = vsel %vm1165, %v1169, %v1158
    %v1171 = vsel %vm1167, %v1170, %v1161
    %v1172 = vld [vmem:[%s12] sm:$0x1]
    %v1174 = vperm.slane %v1172, 0
    %1175 = vrot.lane.b32.xlu0 %v1174, 96
    %v1176 = vpop.permute.xlu0 %1175
    %v1178 = vmul.f32 %v1168, %v1176
    %v1179 = vmul.f32 %v1171, %v1176
    %1182 = vrot.lane.b32.xlu0 %v1178, 32
    %v1183 = vpop.permute.xlu0 %1182
    %1184 = vrot.lane.b32.xlu0 %v1179, 32
    %v1185 = vpop.permute.xlu0 %1184
    %v1188 = vsel %vm185, %v1183, 0.0
    %1189 = vadd.xlane.f32.xlu0 %v1188
    %v1190 = vpop.xlane.xlu0 %1189
    %v1191 = vsel %vm185, %v1185, 0.0
    %1192 = vadd.xlane.f32.xlu0 %v1191
    %v1193 = vpop.xlane.xlu0 %1192
    %v1194 = vld [vmem:[#allocation2] sm:$0x1]
    %v1196 = vperm.slane %v1194, 0
    %v1198 = vadd.f32 %v1190, %v1196
    %v1199 = vadd.f32 %v1193, %v1196
    %vm1200 = vcmp.gt.f32.partialorder %v1198, 0.0
    %vm1201 = vcmp.gt.f32.partialorder %v1199, 0.0
    %v1202 = vmul.f32 %v1198, 0.01
    %v1203 = vmul.f32 %v1199, 0.01
    %v1204 = vsel %vm1200, %v1198, %v1202
    %v1205 = vsel %vm1201, %v1199, %v1203
    %vm1206 = vcmask 7168
    %1207 = vst.msk [vmem:[%s14] sm:$0xff] %vm1206, %v1204
    %1208 = vst.msk [vmem:[%s14 + $0x8] sm:$0xff] %vm1206, %v1205
    // Predicated region
    $region82: #{tpu_custom_call.1} parent=1 // pred_check
      _
    $region83: #{tpu_custom_call.1} parent=1 // pred_check_branch
      %1210 = sbr.rel (0) target = $region85
    $region84: #{tpu_custom_call.1} parent=1 // pred_region
      _
    $region85: #{tpu_custom_call.1} parent=1 // pred_fallthru
      _
    // Predicated region
    $region86: #{tpu_custom_call.1} parent=1 // pred_check
      _
    $region87: #{tpu_custom_call.1} parent=1 // pred_check_branch
      %1212 = sbr.rel (0) target = $region89
    $region88: #{tpu_custom_call.1} parent=1 // pred_region
      _
    $region89: #{tpu_custom_call.1} parent=1 // pred_fallthru
      _
    %1213 = vsyncpa [#allocation4], 1
    %1214 = vsyncpa [#allocation6], 1
    %1215 = vsyncpa [#allocation9], 1
    %1216 = vsyncpa [#allocation12], 1

</llo_original>
